<compile_context>
chip_gen: v7x
topology: tpu7x:2x2x1
jax: 0.10.0
libtpu: 0.0.40
codegen_flags: <defaults>
</compile_context>

<pallas_src>
import jax
import jax.numpy as jnp
from jax.experimental import pallas as pl
from jax.experimental.pallas import tpu as pltpu

# ----------------------------- model config --------------------------------
VOCAB_SIZE = 50
EMBED_DIM = 32
HIDDEN_DIM = 32
NUM_LAYERS = 2
DROPOUT = 0.1          # unused at eval time

BATCH = 2
SEQ_LEN = 8

BATCH_PAD = 8          # pad batch to a full sublane tile
VOCAB_PAD = 64         # pad packed embedding-projection rows to a multiple of 8


# ------------------------- packed-weight slab layout -------------------------
def _slab_layout():
    """Row offsets of each section in the single packed (rows, 4H) weight slab."""
    h = HIDDEN_DIM
    r = 0
    emb_off = r          # embedding @ W_ih0^T + b0  (gather + input-proj fused)
    r += VOCAB_PAD
    whh0_off = r         # W_hh0^T
    r += h
    layer_offs = [None]  # per layer l>=1: (wcat_off, bias_off)
    for _ in range(1, NUM_LAYERS):
        ow = r
        r += 2 * h       # [W_ih_l^T ; W_hh_l^T]
        ob = r
        r += 8           # bias row (padded to 8 rows for aligned slicing)
        layer_offs.append((ow, ob))
    return emb_off, whh0_off, layer_offs, r


EMB_OFF, WHH0_OFF, LAYER_OFFS, SLAB_ROWS = _slab_layout()


def pack_params(params):
    """One-time weight packing (PyTorch layout -> single kernel slab).

    Done once at init time, NOT per forward call. Gate order (i, f, g, o).
    """
    h = HIDDEN_DIM
    emb = params["embedding"].astype(jnp.float32)
    w_ih0, w_hh0, b_ih0, b_hh0 = [p.astype(jnp.float32) for p in params["lstm"][0]]

    # Fuse embedding gather with layer-0 input projection (+ folded bias).
    emb_proj = emb @ w_ih0.T + (b_ih0 + b_hh0)[None, :]                 # (V, 4H)
    emb_proj = jnp.pad(emb_proj, ((0, VOCAB_PAD - VOCAB_SIZE), (0, 0)))

    sections = [emb_proj, w_hh0.T]
    for l in range(1, NUM_LAYERS):
        w_ih, w_hh, b_ih, b_hh = [p.astype(jnp.float32) for p in params["lstm"][l]]
        wcat = jnp.concatenate([w_ih.T, w_hh.T], axis=0)                # (2H, 4H)
        brow = jnp.zeros((8, 4 * h), jnp.float32).at[0].set(b_ih + b_hh)
        sections += [wcat, brow]
    slab = jnp.concatenate(sections, axis=0)                            # (R, 4H)
    assert slab.shape == (SLAB_ROWS, 4 * h)
    return {"w": slab}


# --------------------------- fused encoder kernel ---------------------------
def _make_encoder_kernel(num_layers, T, B, BP, H):
    """Build the fused multi-layer wavefront LSTM kernel (all sizes static)."""

    def kernel(tok_ref, w_ref, out_ref, h_ref, c_ref):
        f32 = jnp.float32

        # ---- fused embedding gather + layer-0 input projection + bias ------
        tok = tok_ref[...]                                          # (T*BP, 1) i32
        viota = jax.lax.broadcasted_iota(jnp.int32, (T * BP, VOCAB_PAD), 1)
        onehot = (tok == viota).astype(f32)                         # (T*BP, VP)
        xp0 = jnp.dot(onehot, w_ref[EMB_OFF:EMB_OFF + VOCAB_PAD, :],
                      preferred_element_type=f32)                   # (T*BP, 4H)

        whh0 = w_ref[WHH0_OFF:WHH0_OFF + H, :]                      # (H, 4H)
        wcat, brow = [], []
        for l in range(1, num_layers):
            ow, ob = LAYER_OFFS[l]
            wcat.append(w_ref[ow:ow + 2 * H, :])                    # (2H, 4H)
            brow.append(w_ref[ob:ob + 1, :])                        # (1, 4H)

        h = [jnp.zeros((BP, H), f32) for _ in range(num_layers)]
        c = [jnp.zeros((BP, H), f32) for _ in range(num_layers)]

        def cell(gates, c_prev):
            # One sigmoid + one tanh over the full (BP, 4H) gate tile (EUP),
            # gates split afterwards with cheap lane slices.
            sg = jax.nn.sigmoid(gates)
            tg = jnp.tanh(gates)
            i_g, f_g, o_g = sg[:, 0:H], sg[:, H:2 * H], sg[:, 3 * H:4 * H]
            g_g = tg[:, 2 * H:3 * H]
            c_new = f_g * c_prev + i_g * g_g
            h_new = o_g * jnp.tanh(c_new)
            return h_new, c_new

        # ---- wavefront over (layer, time): step s runs layer l at t = s - l.
        # The per-step matmuls of different layers are independent and pipeline
        # in the MXU. Fully unrolled (T, L static and tiny).
        for s in range(T + num_layers - 1):
            h_in = list(h)                  # snapshot of entering hidden states
            for l in range(num_layers):
                t = s - l
                if not (0 <= t < T):
                    continue
                if l == 0:
                    # ONE fused (BP,H)@(H,4H) gate matmul (was 4x (H,H)).
                    g = xp0[t * BP:(t + 1) * BP, :] + jnp.dot(
                        h_in[0], whh0, preferred_element_type=f32)
                else:
                    # Input projection + recurrence fused into ONE
                    # (BP,2H)@(2H,4H) matmul on [h_{l-1}(t), h_l(t-1)].
                    z = jnp.concatenate([h_in[l - 1], h_in[l]], axis=1)
                    g = jnp.dot(z, wcat[l - 1],
                                preferred_element_type=f32) + brow[l - 1]
                h[l], c[l] = cell(g, c[l])
                if l == num_layers - 1:
                    # Lane-dense (B, T*H) sequence output.
                    out_ref[:, t * H:(t + 1) * H] = h[l][:B, :]

        # Final states: written exactly once per layer.
        for l in range(num_layers):
            h_ref[l] = h[l][:B, :]
            c_ref[l] = c[l][:B, :]

    return kernel


def _encoder_pallas_call(tok_col, w_slab, T, B):
    H, L = HIDDEN_DIM, NUM_LAYERS
    vmem = pl.BlockSpec(memory_space=pltpu.MemorySpace.VMEM)
    out_shapes = (
        jax.ShapeDtypeStruct((B, T * H), jnp.float32),    # per-step outputs
        jax.ShapeDtypeStruct((L, B, H), jnp.float32),     # final hidden
        jax.ShapeDtypeStruct((L, B, H), jnp.float32),     # final cell
    )
    return pl.pallas_call(
        _make_encoder_kernel(L, T, B, BATCH_PAD, H),
        out_shape=out_shapes,
        in_specs=[vmem, vmem],
        out_specs=(vmem, vmem, vmem),
    )(tok_col, w_slab)


# ------------------------------ forward pass --------------------------------
@jax.jit
def lstm_encoder_forward(packed, x_tokens):
    """x_tokens: (B, T) int32 -> (outputs (B,T,H), (hidden (L,B,H), cell (L,B,H)))."""
    B, T = x_tokens.shape
    assert B <= BATCH_PAD
    # Tiny int32 token prep (time-major + batch pad); the f32 embedding gather,
    # its HBM round trip and the (T*B,E) transpose copy now live in the kernel.
    # Padded batch rows get token 0: they run a valid dummy trajectory that is
    # never written to the outputs.
    tok_tm = jnp.pad(jnp.transpose(x_tokens), ((0, 0), (0, BATCH_PAD - B)))
    tok_col = tok_tm.reshape(T * BATCH_PAD, 1).astype(jnp.int32)
    # TODO(synk): embedding/inter-layer dropout treated as identity (eval mode).
    out_flat, hidden, cell = _encoder_pallas_call(tok_col, packed["w"], T, B)
    outputs = out_flat.reshape(B, T, HIDDEN_DIM)     # bitcast reshape, no copy
    return outputs, (hidden, cell)


# ------------------------------ pure-JAX reference ---------------------------
def lstm_encoder_ref(params, x_tokens):
    emb = jnp.take(params["embedding"], x_tokens, axis=0).astype(jnp.float32)
    B, T, _ = emb.shape
    H = HIDDEN_DIM
    seq = emb
    hs, cs = [], []
    for (w_ih, w_hh, b_ih, b_hh) in params["lstm"]:
        h = jnp.zeros((B, H), jnp.float32)
        c = jnp.zeros((B, H), jnp.float32)
        outs = []
        for t in range(T):
            g = seq[:, t, :] @ w_ih.T + h @ w_hh.T + b_ih + b_hh
            i_g = jax.nn.sigmoid(g[:, 0 * H:1 * H])
            f_g = jax.nn.sigmoid(g[:, 1 * H:2 * H])
            g_g = jnp.tanh(g[:, 2 * H:3 * H])
            o_g = jax.nn.sigmoid(g[:, 3 * H:4 * H])
            c = f_g * c + i_g * g_g
            h = o_g * jnp.tanh(c)
            outs.append(h)
        seq = jnp.stack(outs, axis=1)
        hs.append(h)
        cs.append(c)
    return seq, (jnp.stack(hs), jnp.stack(cs))


# ----------------------------- parameter init -------------------------------
def init_params(key):
    """PyTorch-style init: Embedding ~ N(0,1), LSTM ~ U(-1/sqrt(H), 1/sqrt(H))."""
    bound = 1.0 / float(HIDDEN_DIM) ** 0.5
    keys = iter(jax.random.split(key, 4 * NUM_LAYERS + 1))

    def uni(k, shape):
        return jax.random.uniform(k, shape, jnp.float32, -bound, bound)

    emb = jax.random.normal(next(keys), (VOCAB_SIZE, EMBED_DIM), jnp.float32)
    layers = []
    for l in range(NUM_LAYERS):
        in_dim = EMBED_DIM if l == 0 else HIDDEN_DIM
        w_ih = uni(next(keys), (4 * HIDDEN_DIM, in_dim))
        w_hh = uni(next(keys), (4 * HIDDEN_DIM, HIDDEN_DIM))
        b_ih = uni(next(keys), (4 * HIDDEN_DIM,))
        b_hh = uni(next(keys), (4 * HIDDEN_DIM,))
        layers.append((w_ih, w_hh, b_ih, b_hh))
    return {"embedding": emb, "lstm": layers}


# ----------------------------------- main ------------------------------------
if __name__ == "__main__":
    key = jax.random.PRNGKey(0)
    k_params, k_x = jax.random.split(key)

    params = init_params(k_params)
    packed = pack_params(params)            # one-time weight packing (not per call)
    x = jax.random.randint(k_x, (BATCH, SEQ_LEN), 0, VOCAB_SIZE, dtype=jnp.int32)

    outputs, (hidden, cell) = lstm_encoder_forward(packed, x)
    outputs = jax.block_until_ready(outputs)

    assert outputs.shape == (BATCH, SEQ_LEN, HIDDEN_DIM), outputs.shape
    assert hidden.shape == (NUM_LAYERS, BATCH, HIDDEN_DIM), hidden.shape
    assert cell.shape == (NUM_LAYERS, BATCH, HIDDEN_DIM), cell.shape
    assert outputs.dtype == jnp.float32
    assert bool(jnp.all(jnp.isfinite(outputs)))

    ref_out, (ref_h, ref_c) = lstm_encoder_ref(params, x)
    assert bool(jnp.allclose(outputs, ref_out, atol=1e-3, rtol=1e-3))
    assert bool(jnp.allclose(hidden, ref_h, atol=1e-3, rtol=1e-3))
    assert bool(jnp.allclose(cell, ref_c, atol=1e-3, rtol=1e-3))

    print("KERNEL_OK")
</pallas_src>

<mosaic_0001>
module attributes {stable_mosaic.version = 11 : i64} {
  func.func @kernel(%arg0: memref<64x1xi32, #tpu.memory_space<vmem>>, %arg1: memref<168x128xf32, #tpu.memory_space<vmem>>, %arg2: memref<2x256xf32, #tpu.memory_space<vmem>>, %arg3: memref<2x2x32xf32, #tpu.memory_space<vmem>>, %arg4: memref<2x2x32xf32, #tpu.memory_space<vmem>>) attributes {dimension_semantics = [], scalar_prefetch = 0 : i64, scratch_operands = 0 : i64, tpu.core_type = #tpu.core_type<tc>} {
    %c0 = arith.constant 0 : index
    %c0_0 = arith.constant 0 : index
    %0 = vector.load %arg0[%c0, %c0_0] : memref<64x1xi32, #tpu.memory_space<vmem>>, vector<64x1xi32>
    %1 = tpu.iota {dimensions = array<i32: 1>} : vector<64x64xi32>
    %2 = vector.broadcast %0 : vector<64x1xi32> to vector<64x64xi32>
    %3 = arith.cmpi eq, %2, %1 : vector<64x64xi32>
    %4 = arith.extui %3 : vector<64x64xi1> to vector<64x64xi32>
    %5 = arith.sitofp %4 : vector<64x64xi32> to vector<64x64xf32>
    %c0_1 = arith.constant 0 : index
    %c0_2 = arith.constant 0 : index
    %6 = vector.load %arg1[%c0_1, %c0_2] : memref<168x128xf32, #tpu.memory_space<vmem>>, vector<64x128xf32>
    %cst = arith.constant dense<0.000000e+00> : vector<64x128xf32>
    %7 = tpu.matmul %5, %6, %cst {dimension_numbers = #tpu.dot_dimension_numbers<[1], [0], [0], [1], [0, 0, 1, 1], [], []>} : vector<64x64xf32>, vector<64x128xf32>, vector<64x128xf32> -> vector<64x128xf32>
    %c64 = arith.constant 64 : index
    %c0_3 = arith.constant 0 : index
    %8 = vector.load %arg1[%c64, %c0_3] : memref<168x128xf32, #tpu.memory_space<vmem>>, vector<32x128xf32>
    %c96 = arith.constant 96 : index
    %c0_4 = arith.constant 0 : index
    %9 = vector.load %arg1[%c96, %c0_4] : memref<168x128xf32, #tpu.memory_space<vmem>>, vector<64x128xf32>
    %c160 = arith.constant 160 : index
    %c0_5 = arith.constant 0 : index
    %10 = vector.load %arg1[%c160, %c0_5] : memref<168x128xf32, #tpu.memory_space<vmem>>, vector<1x128xf32>
    %cst_6 = arith.constant 0.000000e+00 : f32
    %11 = vector.broadcast %cst_6 : f32 to vector<8x32xf32>
    %cst_7 = arith.constant 0.000000e+00 : f32
    %12 = vector.broadcast %cst_7 : f32 to vector<8x32xf32>
    %cst_8 = arith.constant 0.000000e+00 : f32
    %13 = vector.broadcast %cst_8 : f32 to vector<8x32xf32>
    %cst_9 = arith.constant 0.000000e+00 : f32
    %14 = vector.broadcast %cst_9 : f32 to vector<8x32xf32>
    %15 = vector.extract_strided_slice %7 {offsets = [0, 0], sizes = [8, 128], strides = [1, 1]} : vector<64x128xf32> to vector<8x128xf32>
    %cst_10 = arith.constant dense<0.000000e+00> : vector<8x128xf32>
    %16 = tpu.matmul %11, %8, %cst_10 {dimension_numbers = #tpu.dot_dimension_numbers<[1], [0], [0], [1], [0, 0, 1, 1], [], []>} : vector<8x32xf32>, vector<32x128xf32>, vector<8x128xf32> -> vector<8x128xf32>
    %17 = arith.addf %15, %16 : vector<8x128xf32>
    %18 = arith.negf %17 : vector<8x128xf32>
    %19 = math.exp %18 : vector<8x128xf32>
    %cst_11 = arith.constant 1.000000e+00 : f32
    %20 = vector.broadcast %cst_11 : f32 to vector<8x128xf32>
    %21 = arith.addf %20, %19 : vector<8x128xf32>
    %22 = arith.divf %20, %21 : vector<8x128xf32>
    %23 = math.tanh %17 : vector<8x128xf32>
    %24 = vector.extract_strided_slice %22 {offsets = [0, 0], sizes = [8, 32], strides = [1, 1]} : vector<8x128xf32> to vector<8x32xf32>
    %25 = vector.extract_strided_slice %22 {offsets = [0, 32], sizes = [8, 32], strides = [1, 1]} : vector<8x128xf32> to vector<8x32xf32>
    %26 = vector.extract_strided_slice %22 {offsets = [0, 96], sizes = [8, 32], strides = [1, 1]} : vector<8x128xf32> to vector<8x32xf32>
    %27 = vector.extract_strided_slice %23 {offsets = [0, 64], sizes = [8, 32], strides = [1, 1]} : vector<8x128xf32> to vector<8x32xf32>
    %28 = arith.mulf %25, %13 : vector<8x32xf32>
    %29 = arith.mulf %24, %27 : vector<8x32xf32>
    %30 = arith.addf %28, %29 : vector<8x32xf32>
    %31 = math.tanh %30 : vector<8x32xf32>
    %32 = arith.mulf %26, %31 : vector<8x32xf32>
    %33 = vector.extract_strided_slice %7 {offsets = [8, 0], sizes = [8, 128], strides = [1, 1]} : vector<64x128xf32> to vector<8x128xf32>
    %cst_12 = arith.constant dense<0.000000e+00> : vector<8x128xf32>
    %34 = tpu.matmul %32, %8, %cst_12 {dimension_numbers = #tpu.dot_dimension_numbers<[1], [0], [0], [1], [0, 0, 1, 1], [], []>} : vector<8x32xf32>, vector<32x128xf32>, vector<8x128xf32> -> vector<8x128xf32>
    %35 = arith.addf %33, %34 : vector<8x128xf32>
    %36 = arith.negf %35 : vector<8x128xf32>
    %37 = math.exp %36 : vector<8x128xf32>
    %cst_13 = arith.constant 1.000000e+00 : f32
    %38 = vector.broadcast %cst_13 : f32 to vector<8x128xf32>
    %39 = arith.addf %38, %37 : vector<8x128xf32>
    %40 = arith.divf %38, %39 : vector<8x128xf32>
    %41 = math.tanh %35 : vector<8x128xf32>
    %42 = vector.extract_strided_slice %40 {offsets = [0, 0], sizes = [8, 32], strides = [1, 1]} : vector<8x128xf32> to vector<8x32xf32>
    %43 = vector.extract_strided_slice %40 {offsets = [0, 32], sizes = [8, 32], strides = [1, 1]} : vector<8x128xf32> to vector<8x32xf32>
    %44 = vector.extract_strided_slice %40 {offsets = [0, 96], sizes = [8, 32], strides = [1, 1]} : vector<8x128xf32> to vector<8x32xf32>
    %45 = vector.extract_strided_slice %41 {offsets = [0, 64], sizes = [8, 32], strides = [1, 1]} : vector<8x128xf32> to vector<8x32xf32>
    %46 = arith.mulf %43, %30 : vector<8x32xf32>
    %47 = arith.mulf %42, %45 : vector<8x32xf32>
    %48 = arith.addf %46, %47 : vector<8x32xf32>
    %49 = math.tanh %48 : vector<8x32xf32>
    %50 = arith.mulf %44, %49 : vector<8x32xf32>
    %51 = tpu.concatenate %32, %12 in 1 : vector<8x32xf32>, vector<8x32xf32> -> vector<8x64xf32>
    %cst_14 = arith.constant dense<0.000000e+00> : vector<8x128xf32>
    %52 = tpu.matmul %51, %9, %cst_14 {dimension_numbers = #tpu.dot_dimension_numbers<[1], [0], [0], [1], [0, 0, 1, 1], [], []>} : vector<8x64xf32>, vector<64x128xf32>, vector<8x128xf32> -> vector<8x128xf32>
    %53 = vector.broadcast %10 : vector<1x128xf32> to vector<8x128xf32>
    %54 = arith.addf %52, %53 : vector<8x128xf32>
    %55 = arith.negf %54 : vector<8x128xf32>
    %56 = math.exp %55 : vector<8x128xf32>
    %cst_15 = arith.constant 1.000000e+00 : f32
    %57 = vector.broadcast %cst_15 : f32 to vector<8x128xf32>
    %58 = arith.addf %57, %56 : vector<8x128xf32>
    %59 = arith.divf %57, %58 : vector<8x128xf32>
    %60 = math.tanh %54 : vector<8x128xf32>
    %61 = vector.extract_strided_slice %59 {offsets = [0, 0], sizes = [8, 32], strides = [1, 1]} : vector<8x128xf32> to vector<8x32xf32>
    %62 = vector.extract_strided_slice %59 {offsets = [0, 32], sizes = [8, 32], strides = [1, 1]} : vector<8x128xf32> to vector<8x32xf32>
    %63 = vector.extract_strided_slice %59 {offsets = [0, 96], sizes = [8, 32], strides = [1, 1]} : vector<8x128xf32> to vector<8x32xf32>
    %64 = vector.extract_strided_slice %60 {offsets = [0, 64], sizes = [8, 32], strides = [1, 1]} : vector<8x128xf32> to vector<8x32xf32>
    %65 = arith.mulf %62, %14 : vector<8x32xf32>
    %66 = arith.mulf %61, %64 : vector<8x32xf32>
    %67 = arith.addf %65, %66 : vector<8x32xf32>
    %68 = math.tanh %67 : vector<8x32xf32>
    %69 = arith.mulf %63, %68 : vector<8x32xf32>
    %70 = vector.extract_strided_slice %69 {offsets = [0, 0], sizes = [2, 32], strides = [1, 1]} : vector<8x32xf32> to vector<2x32xf32>
    %c0_16 = arith.constant 0 : index
    %c0_17 = arith.constant 0 : index
    %71 = vector.load %arg2[%c0_16, %c0_17] : memref<2x256xf32, #tpu.memory_space<vmem>>, vector<2x32xf32>
    tpu.vector_store %arg2[%c0_16, %c0_17], %70 {strides = array<i32>} : memref<2x256xf32, #tpu.memory_space<vmem>>, vector<2x32xf32>,
    %72 = vector.extract_strided_slice %7 {offsets = [16, 0], sizes = [8, 128], strides = [1, 1]} : vector<64x128xf32> to vector<8x128xf32>
    %cst_18 = arith.constant dense<0.000000e+00> : vector<8x128xf32>
    %73 = tpu.matmul %50, %8, %cst_18 {dimension_numbers = #tpu.dot_dimension_numbers<[1], [0], [0], [1], [0, 0, 1, 1], [], []>} : vector<8x32xf32>, vector<32x128xf32>, vector<8x128xf32> -> vector<8x128xf32>
    %74 = arith.addf %72, %73 : vector<8x128xf32>
    %75 = arith.negf %74 : vector<8x128xf32>
    %76 = math.exp %75 : vector<8x128xf32>
    %cst_19 = arith.constant 1.000000e+00 : f32
    %77 = vector.broadcast %cst_19 : f32 to vector<8x128xf32>
    %78 = arith.addf %77, %76 : vector<8x128xf32>
    %79 = arith.divf %77, %78 : vector<8x128xf32>
    %80 = math.tanh %74 : vector<8x128xf32>
    %81 = vector.extract_strided_slice %79 {offsets = [0, 0], sizes = [8, 32], strides = [1, 1]} : vector<8x128xf32> to vector<8x32xf32>
    %82 = vector.extract_strided_slice %79 {offsets = [0, 32], sizes = [8, 32], strides = [1, 1]} : vector<8x128xf32> to vector<8x32xf32>
    %83 = vector.extract_strided_slice %79 {offsets = [0, 96], sizes = [8, 32], strides = [1, 1]} : vector<8x128xf32> to vector<8x32xf32>
    %84 = vector.extract_strided_slice %80 {offsets = [0, 64], sizes = [8, 32], strides = [1, 1]} : vector<8x128xf32> to vector<8x32xf32>
    %85 = arith.mulf %82, %48 : vector<8x32xf32>
    %86 = arith.mulf %81, %84 : vector<8x32xf32>
    %87 = arith.addf %85, %86 : vector<8x32xf32>
    %88 = math.tanh %87 : vector<8x32xf32>
    %89 = arith.mulf %83, %88 : vector<8x32xf32>
    %90 = tpu.concatenate %50, %69 in 1 : vector<8x32xf32>, vector<8x32xf32> -> vector<8x64xf32>
    %cst_20 = arith.constant dense<0.000000e+00> : vector<8x128xf32>
    %91 = tpu.matmul %90, %9, %cst_20 {dimension_numbers = #tpu.dot_dimension_numbers<[1], [0], [0], [1], [0, 0, 1, 1], [], []>} : vector<8x64xf32>, vector<64x128xf32>, vector<8x128xf32> -> vector<8x128xf32>
    %92 = vector.broadcast %10 : vector<1x128xf32> to vector<8x128xf32>
    %93 = arith.addf %91, %92 : vector<8x128xf32>
    %94 = arith.negf %93 : vector<8x128xf32>
    %95 = math.exp %94 : vector<8x128xf32>
    %cst_21 = arith.constant 1.000000e+00 : f32
    %96 = vector.broadcast %cst_21 : f32 to vector<8x128xf32>
    %97 = arith.addf %96, %95 : vector<8x128xf32>
    %98 = arith.divf %96, %97 : vector<8x128xf32>
    %99 = math.tanh %93 : vector<8x128xf32>
    %100 = vector.extract_strided_slice %98 {offsets = [0, 0], sizes = [8, 32], strides = [1, 1]} : vector<8x128xf32> to vector<8x32xf32>
    %101 = vector.extract_strided_slice %98 {offsets = [0, 32], sizes = [8, 32], strides = [1, 1]} : vector<8x128xf32> to vector<8x32xf32>
    %102 = vector.extract_strided_slice %98 {offsets = [0, 96], sizes = [8, 32], strides = [1, 1]} : vector<8x128xf32> to vector<8x32xf32>
    %103 = vector.extract_strided_slice %99 {offsets = [0, 64], sizes = [8, 32], strides = [1, 1]} : vector<8x128xf32> to vector<8x32xf32>
    %104 = arith.mulf %101, %67 : vector<8x32xf32>
    %105 = arith.mulf %100, %103 : vector<8x32xf32>
    %106 = arith.addf %104, %105 : vector<8x32xf32>
    %107 = math.tanh %106 : vector<8x32xf32>
    %108 = arith.mulf %102, %107 : vector<8x32xf32>
    %109 = vector.extract_strided_slice %108 {offsets = [0, 0], sizes = [2, 32], strides = [1, 1]} : vector<8x32xf32> to vector<2x32xf32>
    %c0_22 = arith.constant 0 : index
    %c32 = arith.constant 32 : index
    %110 = vector.load %arg2[%c0_22, %c32] : memref<2x256xf32, #tpu.memory_space<vmem>>, vector<2x32xf32>
    tpu.vector_store %arg2[%c0_22, %c32], %109 {strides = array<i32>} : memref<2x256xf32, #tpu.memory_space<vmem>>, vector<2x32xf32>,
    %111 = vector.extract_strided_slice %7 {offsets = [24, 0], sizes = [8, 128], strides = [1, 1]} : vector<64x128xf32> to vector<8x128xf32>
    %cst_23 = arith.constant dense<0.000000e+00> : vector<8x128xf32>
    %112 = tpu.matmul %89, %8, %cst_23 {dimension_numbers = #tpu.dot_dimension_numbers<[1], [0], [0], [1], [0, 0, 1, 1], [], []>} : vector<8x32xf32>, vector<32x128xf32>, vector<8x128xf32> -> vector<8x128xf32>
    %113 = arith.addf %111, %112 : vector<8x128xf32>
    %114 = arith.negf %113 : vector<8x128xf32>
    %115 = math.exp %114 : vector<8x128xf32>
    %cst_24 = arith.constant 1.000000e+00 : f32
    %116 = vector.broadcast %cst_24 : f32 to vector<8x128xf32>
    %117 = arith.addf %116, %115 : vector<8x128xf32>
    %118 = arith.divf %116, %117 : vector<8x128xf32>
    %119 = math.tanh %113 : vector<8x128xf32>
    %120 = vector.extract_strided_slice %118 {offsets = [0, 0], sizes = [8, 32], strides = [1, 1]} : vector<8x128xf32> to vector<8x32xf32>
    %121 = vector.extract_strided_slice %118 {offsets = [0, 32], sizes = [8, 32], strides = [1, 1]} : vector<8x128xf32> to vector<8x32xf32>
    %122 = vector.extract_strided_slice %118 {offsets = [0, 96], sizes = [8, 32], strides = [1, 1]} : vector<8x128xf32> to vector<8x32xf32>
    %123 = vector.extract_strided_slice %119 {offsets = [0, 64], sizes = [8, 32], strides = [1, 1]} : vector<8x128xf32> to vector<8x32xf32>
    %124 = arith.mulf %121, %87 : vector<8x32xf32>
    %125 = arith.mulf %120, %123 : vector<8x32xf32>
    %126 = arith.addf %124, %125 : vector<8x32xf32>
    %127 = math.tanh %126 : vector<8x32xf32>
    %128 = arith.mulf %122, %127 : vector<8x32xf32>
    %129 = tpu.concatenate %89, %108 in 1 : vector<8x32xf32>, vector<8x32xf32> -> vector<8x64xf32>
    %cst_25 = arith.constant dense<0.000000e+00> : vector<8x128xf32>
    %130 = tpu.matmul %129, %9, %cst_25 {dimension_numbers = #tpu.dot_dimension_numbers<[1], [0], [0], [1], [0, 0, 1, 1], [], []>} : vector<8x64xf32>, vector<64x128xf32>, vector<8x128xf32> -> vector<8x128xf32>
    %131 = vector.broadcast %10 : vector<1x128xf32> to vector<8x128xf32>
    %132 = arith.addf %130, %131 : vector<8x128xf32>
    %133 = arith.negf %132 : vector<8x128xf32>
    %134 = math.exp %133 : vector<8x128xf32>
    %cst_26 = arith.constant 1.000000e+00 : f32
    %135 = vector.broadcast %cst_26 : f32 to vector<8x128xf32>
    %136 = arith.addf %135, %134 : vector<8x128xf32>
    %137 = arith.divf %135, %136 : vector<8x128xf32>
    %138 = math.tanh %132 : vector<8x128xf32>
    %139 = vector.extract_strided_slice %137 {offsets = [0, 0], sizes = [8, 32], strides = [1, 1]} : vector<8x128xf32> to vector<8x32xf32>
    %140 = vector.extract_strided_slice %137 {offsets = [0, 32], sizes = [8, 32], strides = [1, 1]} : vector<8x128xf32> to vector<8x32xf32>
    %141 = vector.extract_strided_slice %137 {offsets = [0, 96], sizes = [8, 32], strides = [1, 1]} : vector<8x128xf32> to vector<8x32xf32>
    %142 = vector.extract_strided_slice %138 {offsets = [0, 64], sizes = [8, 32], strides = [1, 1]} : vector<8x128xf32> to vector<8x32xf32>
    %143 = arith.mulf %140, %106 : vector<8x32xf32>
    %144 = arith.mulf %139, %142 : vector<8x32xf32>
    %145 = arith.addf %143, %144 : vector<8x32xf32>
    %146 = math.tanh %145 : vector<8x32xf32>
    %147 = arith.mulf %141, %146 : vector<8x32xf32>
    %148 = vector.extract_strided_slice %147 {offsets = [0, 0], sizes = [2, 32], strides = [1, 1]} : vector<8x32xf32> to vector<2x32xf32>
    %c0_27 = arith.constant 0 : index
    %c64_28 = arith.constant 64 : index
    %149 = vector.load %arg2[%c0_27, %c64_28] : memref<2x256xf32, #tpu.memory_space<vmem>>, vector<2x32xf32>
    tpu.vector_store %arg2[%c0_27, %c64_28], %148 {strides = array<i32>} : memref<2x256xf32, #tpu.memory_space<vmem>>, vector<2x32xf32>,
    %150 = vector.extract_strided_slice %7 {offsets = [32, 0], sizes = [8, 128], strides = [1, 1]} : vector<64x128xf32> to vector<8x128xf32>
    %cst_29 = arith.constant dense<0.000000e+00> : vector<8x128xf32>
    %151 = tpu.matmul %128, %8, %cst_29 {dimension_numbers = #tpu.dot_dimension_numbers<[1], [0], [0], [1], [0, 0, 1, 1], [], []>} : vector<8x32xf32>, vector<32x128xf32>, vector<8x128xf32> -> vector<8x128xf32>
    %152 = arith.addf %150, %151 : vector<8x128xf32>
    %153 = arith.negf %152 : vector<8x128xf32>
    %154 = math.exp %153 : vector<8x128xf32>
    %cst_30 = arith.constant 1.000000e+00 : f32
    %155 = vector.broadcast %cst_30 : f32 to vector<8x128xf32>
    %156 = arith.addf %155, %154 : vector<8x128xf32>
    %157 = arith.divf %155, %156 : vector<8x128xf32>
    %158 = math.tanh %152 : vector<8x128xf32>
    %159 = vector.extract_strided_slice %157 {offsets = [0, 0], sizes = [8, 32], strides = [1, 1]} : vector<8x128xf32> to vector<8x32xf32>
    %160 = vector.extract_strided_slice %157 {offsets = [0, 32], sizes = [8, 32], strides = [1, 1]} : vector<8x128xf32> to vector<8x32xf32>
    %161 = vector.extract_strided_slice %157 {offsets = [0, 96], sizes = [8, 32], strides = [1, 1]} : vector<8x128xf32> to vector<8x32xf32>
    %162 = vector.extract_strided_slice %158 {offsets = [0, 64], sizes = [8, 32], strides = [1, 1]} : vector<8x128xf32> to vector<8x32xf32>
    %163 = arith.mulf %160, %126 : vector<8x32xf32>
    %164 = arith.mulf %159, %162 : vector<8x32xf32>
    %165 = arith.addf %163, %164 : vector<8x32xf32>
    %166 = math.tanh %165 : vector<8x32xf32>
    %167 = arith.mulf %161, %166 : vector<8x32xf32>
    %168 = tpu.concatenate %128, %147 in 1 : vector<8x32xf32>, vector<8x32xf32> -> vector<8x64xf32>
    %cst_31 = arith.constant dense<0.000000e+00> : vector<8x128xf32>
    %169 = tpu.matmul %168, %9, %cst_31 {dimension_numbers = #tpu.dot_dimension_numbers<[1], [0], [0], [1], [0, 0, 1, 1], [], []>} : vector<8x64xf32>, vector<64x128xf32>, vector<8x128xf32> -> vector<8x128xf32>
    %170 = vector.broadcast %10 : vector<1x128xf32> to vector<8x128xf32>
    %171 = arith.addf %169, %170 : vector<8x128xf32>
    %172 = arith.negf %171 : vector<8x128xf32>
    %173 = math.exp %172 : vector<8x128xf32>
    %cst_32 = arith.constant 1.000000e+00 : f32
    %174 = vector.broadcast %cst_32 : f32 to vector<8x128xf32>
    %175 = arith.addf %174, %173 : vector<8x128xf32>
    %176 = arith.divf %174, %175 : vector<8x128xf32>
    %177 = math.tanh %171 : vector<8x128xf32>
    %178 = vector.extract_strided_slice %176 {offsets = [0, 0], sizes = [8, 32], strides = [1, 1]} : vector<8x128xf32> to vector<8x32xf32>
    %179 = vector.extract_strided_slice %176 {offsets = [0, 32], sizes = [8, 32], strides = [1, 1]} : vector<8x128xf32> to vector<8x32xf32>
    %180 = vector.extract_strided_slice %176 {offsets = [0, 96], sizes = [8, 32], strides = [1, 1]} : vector<8x128xf32> to vector<8x32xf32>
    %181 = vector.extract_strided_slice %177 {offsets = [0, 64], sizes = [8, 32], strides = [1, 1]} : vector<8x128xf32> to vector<8x32xf32>
    %182 = arith.mulf %179, %145 : vector<8x32xf32>
    %183 = arith.mulf %178, %181 : vector<8x32xf32>
    %184 = arith.addf %182, %183 : vector<8x32xf32>
    %185 = math.tanh %184 : vector<8x32xf32>
    %186 = arith.mulf %180, %185 : vector<8x32xf32>
    %187 = vector.extract_strided_slice %186 {offsets = [0, 0], sizes = [2, 32], strides = [1, 1]} : vector<8x32xf32> to vector<2x32xf32>
    %c0_33 = arith.constant 0 : index
    %c96_34 = arith.constant 96 : index
    %188 = vector.load %arg2[%c0_33, %c96_34] : memref<2x256xf32, #tpu.memory_space<vmem>>, vector<2x32xf32>
    tpu.vector_store %arg2[%c0_33, %c96_34], %187 {strides = array<i32>} : memref<2x256xf32, #tpu.memory_space<vmem>>, vector<2x32xf32>,
    %189 = vector.extract_strided_slice %7 {offsets = [40, 0], sizes = [8, 128], strides = [1, 1]} : vector<64x128xf32> to vector<8x128xf32>
    %cst_35 = arith.constant dense<0.000000e+00> : vector<8x128xf32>
    %190 = tpu.matmul %167, %8, %cst_35 {dimension_numbers = #tpu.dot_dimension_numbers<[1], [0], [0], [1], [0, 0, 1, 1], [], []>} : vector<8x32xf32>, vector<32x128xf32>, vector<8x128xf32> -> vector<8x128xf32>
    %191 = arith.addf %189, %190 : vector<8x128xf32>
    %192 = arith.negf %191 : vector<8x128xf32>
    %193 = math.exp %192 : vector<8x128xf32>
    %cst_36 = arith.constant 1.000000e+00 : f32
    %194 = vector.broadcast %cst_36 : f32 to vector<8x128xf32>
    %195 = arith.addf %194, %193 : vector<8x128xf32>
    %196 = arith.divf %194, %195 : vector<8x128xf32>
    %197 = math.tanh %191 : vector<8x128xf32>
    %198 = vector.extract_strided_slice %196 {offsets = [0, 0], sizes = [8, 32], strides = [1, 1]} : vector<8x128xf32> to vector<8x32xf32>
    %199 = vector.extract_strided_slice %196 {offsets = [0, 32], sizes = [8, 32], strides = [1, 1]} : vector<8x128xf32> to vector<8x32xf32>
    %200 = vector.extract_strided_slice %196 {offsets = [0, 96], sizes = [8, 32], strides = [1, 1]} : vector<8x128xf32> to vector<8x32xf32>
    %201 = vector.extract_strided_slice %197 {offsets = [0, 64], sizes = [8, 32], strides = [1, 1]} : vector<8x128xf32> to vector<8x32xf32>
    %202 = arith.mulf %199, %165 : vector<8x32xf32>
    %203 = arith.mulf %198, %201 : vector<8x32xf32>
    %204 = arith.addf %202, %203 : vector<8x32xf32>
    %205 = math.tanh %204 : vector<8x32xf32>
    %206 = arith.mulf %200, %205 : vector<8x32xf32>
    %207 = tpu.concatenate %167, %186 in 1 : vector<8x32xf32>, vector<8x32xf32> -> vector<8x64xf32>
    %cst_37 = arith.constant dense<0.000000e+00> : vector<8x128xf32>
    %208 = tpu.matmul %207, %9, %cst_37 {dimension_numbers = #tpu.dot_dimension_numbers<[1], [0], [0], [1], [0, 0, 1, 1], [], []>} : vector<8x64xf32>, vector<64x128xf32>, vector<8x128xf32> -> vector<8x128xf32>
    %209 = vector.broadcast %10 : vector<1x128xf32> to vector<8x128xf32>
    %210 = arith.addf %208, %209 : vector<8x128xf32>
    %211 = arith.negf %210 : vector<8x128xf32>
    %212 = math.exp %211 : vector<8x128xf32>
    %cst_38 = arith.constant 1.000000e+00 : f32
    %213 = vector.broadcast %cst_38 : f32 to vector<8x128xf32>
    %214 = arith.addf %213, %212 : vector<8x128xf32>
    %215 = arith.divf %213, %214 : vector<8x128xf32>
    %216 = math.tanh %210 : vector<8x128xf32>
    %217 = vector.extract_strided_slice %215 {offsets = [0, 0], sizes = [8, 32], strides = [1, 1]} : vector<8x128xf32> to vector<8x32xf32>
    %218 = vector.extract_strided_slice %215 {offsets = [0, 32], sizes = [8, 32], strides = [1, 1]} : vector<8x128xf32> to vector<8x32xf32>
    %219 = vector.extract_strided_slice %215 {offsets = [0, 96], sizes = [8, 32], strides = [1, 1]} : vector<8x128xf32> to vector<8x32xf32>
    %220 = vector.extract_strided_slice %216 {offsets = [0, 64], sizes = [8, 32], strides = [1, 1]} : vector<8x128xf32> to vector<8x32xf32>
    %221 = arith.mulf %218, %184 : vector<8x32xf32>
    %222 = arith.mulf %217, %220 : vector<8x32xf32>
    %223 = arith.addf %221, %222 : vector<8x32xf32>
    %224 = math.tanh %223 : vector<8x32xf32>
    %225 = arith.mulf %219, %224 : vector<8x32xf32>
    %226 = vector.extract_strided_slice %225 {offsets = [0, 0], sizes = [2, 32], strides = [1, 1]} : vector<8x32xf32> to vector<2x32xf32>
    %c0_39 = arith.constant 0 : index
    %c128 = arith.constant 128 : index
    %227 = vector.load %arg2[%c0_39, %c128] : memref<2x256xf32, #tpu.memory_space<vmem>>, vector<2x32xf32>
    tpu.vector_store %arg2[%c0_39, %c128], %226 {strides = array<i32>} : memref<2x256xf32, #tpu.memory_space<vmem>>, vector<2x32xf32>,
    %228 = vector.extract_strided_slice %7 {offsets = [48, 0], sizes = [8, 128], strides = [1, 1]} : vector<64x128xf32> to vector<8x128xf32>
    %cst_40 = arith.constant dense<0.000000e+00> : vector<8x128xf32>
    %229 = tpu.matmul %206, %8, %cst_40 {dimension_numbers = #tpu.dot_dimension_numbers<[1], [0], [0], [1], [0, 0, 1, 1], [], []>} : vector<8x32xf32>, vector<32x128xf32>, vector<8x128xf32> -> vector<8x128xf32>
    %230 = arith.addf %228, %229 : vector<8x128xf32>
    %231 = arith.negf %230 : vector<8x128xf32>
    %232 = math.exp %231 : vector<8x128xf32>
    %cst_41 = arith.constant 1.000000e+00 : f32
    %233 = vector.broadcast %cst_41 : f32 to vector<8x128xf32>
    %234 = arith.addf %233, %232 : vector<8x128xf32>
    %235 = arith.divf %233, %234 : vector<8x128xf32>
    %236 = math.tanh %230 : vector<8x128xf32>
    %237 = vector.extract_strided_slice %235 {offsets = [0, 0], sizes = [8, 32], strides = [1, 1]} : vector<8x128xf32> to vector<8x32xf32>
    %238 = vector.extract_strided_slice %235 {offsets = [0, 32], sizes = [8, 32], strides = [1, 1]} : vector<8x128xf32> to vector<8x32xf32>
    %239 = vector.extract_strided_slice %235 {offsets = [0, 96], sizes = [8, 32], strides = [1, 1]} : vector<8x128xf32> to vector<8x32xf32>
    %240 = vector.extract_strided_slice %236 {offsets = [0, 64], sizes = [8, 32], strides = [1, 1]} : vector<8x128xf32> to vector<8x32xf32>
    %241 = arith.mulf %238, %204 : vector<8x32xf32>
    %242 = arith.mulf %237, %240 : vector<8x32xf32>
    %243 = arith.addf %241, %242 : vector<8x32xf32>
    %244 = math.tanh %243 : vector<8x32xf32>
    %245 = arith.mulf %239, %244 : vector<8x32xf32>
    %246 = tpu.concatenate %206, %225 in 1 : vector<8x32xf32>, vector<8x32xf32> -> vector<8x64xf32>
    %cst_42 = arith.constant dense<0.000000e+00> : vector<8x128xf32>
    %247 = tpu.matmul %246, %9, %cst_42 {dimension_numbers = #tpu.dot_dimension_numbers<[1], [0], [0], [1], [0, 0, 1, 1], [], []>} : vector<8x64xf32>, vector<64x128xf32>, vector<8x128xf32> -> vector<8x128xf32>
    %248 = vector.broadcast %10 : vector<1x128xf32> to vector<8x128xf32>
    %249 = arith.addf %247, %248 : vector<8x128xf32>
    %250 = arith.negf %249 : vector<8x128xf32>
    %251 = math.exp %250 : vector<8x128xf32>
    %cst_43 = arith.constant 1.000000e+00 : f32
    %252 = vector.broadcast %cst_43 : f32 to vector<8x128xf32>
    %253 = arith.addf %252, %251 : vector<8x128xf32>
    %254 = arith.divf %252, %253 : vector<8x128xf32>
    %255 = math.tanh %249 : vector<8x128xf32>
    %256 = vector.extract_strided_slice %254 {offsets = [0, 0], sizes = [8, 32], strides = [1, 1]} : vector<8x128xf32> to vector<8x32xf32>
    %257 = vector.extract_strided_slice %254 {offsets = [0, 32], sizes = [8, 32], strides = [1, 1]} : vector<8x128xf32> to vector<8x32xf32>
    %258 = vector.extract_strided_slice %254 {offsets = [0, 96], sizes = [8, 32], strides = [1, 1]} : vector<8x128xf32> to vector<8x32xf32>
    %259 = vector.extract_strided_slice %255 {offsets = [0, 64], sizes = [8, 32], strides = [1, 1]} : vector<8x128xf32> to vector<8x32xf32>
    %260 = arith.mulf %257, %223 : vector<8x32xf32>
    %261 = arith.mulf %256, %259 : vector<8x32xf32>
    %262 = arith.addf %260, %261 : vector<8x32xf32>
    %263 = math.tanh %262 : vector<8x32xf32>
    %264 = arith.mulf %258, %263 : vector<8x32xf32>
    %265 = vector.extract_strided_slice %264 {offsets = [0, 0], sizes = [2, 32], strides = [1, 1]} : vector<8x32xf32> to vector<2x32xf32>
    %c0_44 = arith.constant 0 : index
    %c160_45 = arith.constant 160 : index
    %266 = vector.load %arg2[%c0_44, %c160_45] : memref<2x256xf32, #tpu.memory_space<vmem>>, vector<2x32xf32>
    tpu.vector_store %arg2[%c0_44, %c160_45], %265 {strides = array<i32>} : memref<2x256xf32, #tpu.memory_space<vmem>>, vector<2x32xf32>,
    %267 = vector.extract_strided_slice %7 {offsets = [56, 0], sizes = [8, 128], strides = [1, 1]} : vector<64x128xf32> to vector<8x128xf32>
    %cst_46 = arith.constant dense<0.000000e+00> : vector<8x128xf32>
    %268 = tpu.matmul %245, %8, %cst_46 {dimension_numbers = #tpu.dot_dimension_numbers<[1], [0], [0], [1], [0, 0, 1, 1], [], []>} : vector<8x32xf32>, vector<32x128xf32>, vector<8x128xf32> -> vector<8x128xf32>
    %269 = arith.addf %267, %268 : vector<8x128xf32>
    %270 = arith.negf %269 : vector<8x128xf32>
    %271 = math.exp %270 : vector<8x128xf32>
    %cst_47 = arith.constant 1.000000e+00 : f32
    %272 = vector.broadcast %cst_47 : f32 to vector<8x128xf32>
    %273 = arith.addf %272, %271 : vector<8x128xf32>
    %274 = arith.divf %272, %273 : vector<8x128xf32>
    %275 = math.tanh %269 : vector<8x128xf32>
    %276 = vector.extract_strided_slice %274 {offsets = [0, 0], sizes = [8, 32], strides = [1, 1]} : vector<8x128xf32> to vector<8x32xf32>
    %277 = vector.extract_strided_slice %274 {offsets = [0, 32], sizes = [8, 32], strides = [1, 1]} : vector<8x128xf32> to vector<8x32xf32>
    %278 = vector.extract_strided_slice %274 {offsets = [0, 96], sizes = [8, 32], strides = [1, 1]} : vector<8x128xf32> to vector<8x32xf32>
    %279 = vector.extract_strided_slice %275 {offsets = [0, 64], sizes = [8, 32], strides = [1, 1]} : vector<8x128xf32> to vector<8x32xf32>
    %280 = arith.mulf %277, %243 : vector<8x32xf32>
    %281 = arith.mulf %276, %279 : vector<8x32xf32>
    %282 = arith.addf %280, %281 : vector<8x32xf32>
    %283 = math.tanh %282 : vector<8x32xf32>
    %284 = arith.mulf %278, %283 : vector<8x32xf32>
    %285 = tpu.concatenate %245, %264 in 1 : vector<8x32xf32>, vector<8x32xf32> -> vector<8x64xf32>
    %cst_48 = arith.constant dense<0.000000e+00> : vector<8x128xf32>
    %286 = tpu.matmul %285, %9, %cst_48 {dimension_numbers = #tpu.dot_dimension_numbers<[1], [0], [0], [1], [0, 0, 1, 1], [], []>} : vector<8x64xf32>, vector<64x128xf32>, vector<8x128xf32> -> vector<8x128xf32>
    %287 = vector.broadcast %10 : vector<1x128xf32> to vector<8x128xf32>
    %288 = arith.addf %286, %287 : vector<8x128xf32>
    %289 = arith.negf %288 : vector<8x128xf32>
    %290 = math.exp %289 : vector<8x128xf32>
    %cst_49 = arith.constant 1.000000e+00 : f32
    %291 = vector.broadcast %cst_49 : f32 to vector<8x128xf32>
    %292 = arith.addf %291, %290 : vector<8x128xf32>
    %293 = arith.divf %291, %292 : vector<8x128xf32>
    %294 = math.tanh %288 : vector<8x128xf32>
    %295 = vector.extract_strided_slice %293 {offsets = [0, 0], sizes = [8, 32], strides = [1, 1]} : vector<8x128xf32> to vector<8x32xf32>
    %296 = vector.extract_strided_slice %293 {offsets = [0, 32], sizes = [8, 32], strides = [1, 1]} : vector<8x128xf32> to vector<8x32xf32>
    %297 = vector.extract_strided_slice %293 {offsets = [0, 96], sizes = [8, 32], strides = [1, 1]} : vector<8x128xf32> to vector<8x32xf32>
    %298 = vector.extract_strided_slice %294 {offsets = [0, 64], sizes = [8, 32], strides = [1, 1]} : vector<8x128xf32> to vector<8x32xf32>
    %299 = arith.mulf %296, %262 : vector<8x32xf32>
    %300 = arith.mulf %295, %298 : vector<8x32xf32>
    %301 = arith.addf %299, %300 : vector<8x32xf32>
    %302 = math.tanh %301 : vector<8x32xf32>
    %303 = arith.mulf %297, %302 : vector<8x32xf32>
    %304 = vector.extract_strided_slice %303 {offsets = [0, 0], sizes = [2, 32], strides = [1, 1]} : vector<8x32xf32> to vector<2x32xf32>
    %c0_50 = arith.constant 0 : index
    %c192 = arith.constant 192 : index
    %305 = vector.load %arg2[%c0_50, %c192] : memref<2x256xf32, #tpu.memory_space<vmem>>, vector<2x32xf32>
    tpu.vector_store %arg2[%c0_50, %c192], %304 {strides = array<i32>} : memref<2x256xf32, #tpu.memory_space<vmem>>, vector<2x32xf32>,
    %306 = tpu.concatenate %284, %303 in 1 : vector<8x32xf32>, vector<8x32xf32> -> vector<8x64xf32>
    %cst_51 = arith.constant dense<0.000000e+00> : vector<8x128xf32>
    %307 = tpu.matmul %306, %9, %cst_51 {dimension_numbers = #tpu.dot_dimension_numbers<[1], [0], [0], [1], [0, 0, 1, 1], [], []>} : vector<8x64xf32>, vector<64x128xf32>, vector<8x128xf32> -> vector<8x128xf32>
    %308 = vector.broadcast %10 : vector<1x128xf32> to vector<8x128xf32>
    %309 = arith.addf %307, %308 : vector<8x128xf32>
    %310 = arith.negf %309 : vector<8x128xf32>
    %311 = math.exp %310 : vector<8x128xf32>
    %cst_52 = arith.constant 1.000000e+00 : f32
    %312 = vector.broadcast %cst_52 : f32 to vector<8x128xf32>
    %313 = arith.addf %312, %311 : vector<8x128xf32>
    %314 = arith.divf %312, %313 : vector<8x128xf32>
    %315 = math.tanh %309 : vector<8x128xf32>
    %316 = vector.extract_strided_slice %314 {offsets = [0, 0], sizes = [8, 32], strides = [1, 1]} : vector<8x128xf32> to vector<8x32xf32>
    %317 = vector.extract_strided_slice %314 {offsets = [0, 32], sizes = [8, 32], strides = [1, 1]} : vector<8x128xf32> to vector<8x32xf32>
    %318 = vector.extract_strided_slice %314 {offsets = [0, 96], sizes = [8, 32], strides = [1, 1]} : vector<8x128xf32> to vector<8x32xf32>
    %319 = vector.extract_strided_slice %315 {offsets = [0, 64], sizes = [8, 32], strides = [1, 1]} : vector<8x128xf32> to vector<8x32xf32>
    %320 = arith.mulf %317, %301 : vector<8x32xf32>
    %321 = arith.mulf %316, %319 : vector<8x32xf32>
    %322 = arith.addf %320, %321 : vector<8x32xf32>
    %323 = math.tanh %322 : vector<8x32xf32>
    %324 = arith.mulf %318, %323 : vector<8x32xf32>
    %325 = vector.extract_strided_slice %324 {offsets = [0, 0], sizes = [2, 32], strides = [1, 1]} : vector<8x32xf32> to vector<2x32xf32>
    %c0_53 = arith.constant 0 : index
    %c224 = arith.constant 224 : index
    %326 = vector.load %arg2[%c0_53, %c224] : memref<2x256xf32, #tpu.memory_space<vmem>>, vector<2x32xf32>
    tpu.vector_store %arg2[%c0_53, %c224], %325 {strides = array<i32>} : memref<2x256xf32, #tpu.memory_space<vmem>>, vector<2x32xf32>,
    %327 = vector.extract_strided_slice %284 {offsets = [0, 0], sizes = [2, 32], strides = [1, 1]} : vector<8x32xf32> to vector<2x32xf32>
    %c0_54 = arith.constant 0 : index
    %c0_55 = arith.constant 0 : index
    %c0_56 = arith.constant 0 : index
    %328 = vector.load %arg3[%c0_54, %c0_55, %c0_56] : memref<2x2x32xf32, #tpu.memory_space<vmem>>, vector<1x2x32xf32>
    %329 = vector.shape_cast %328 : vector<1x2x32xf32> to vector<2x32xf32>
    %330 = vector.shape_cast %327 : vector<2x32xf32> to vector<1x2x32xf32>
    tpu.vector_store %arg3[%c0_54, %c0_55, %c0_56], %330 {strides = array<i32>} : memref<2x2x32xf32, #tpu.memory_space<vmem>>, vector<1x2x32xf32>,
    %331 = vector.extract_strided_slice %282 {offsets = [0, 0], sizes = [2, 32], strides = [1, 1]} : vector<8x32xf32> to vector<2x32xf32>
    %c0_57 = arith.constant 0 : index
    %c0_58 = arith.constant 0 : index
    %c0_59 = arith.constant 0 : index
    %332 = vector.load %arg4[%c0_57, %c0_58, %c0_59] : memref<2x2x32xf32, #tpu.memory_space<vmem>>, vector<1x2x32xf32>
    %333 = vector.shape_cast %332 : vector<1x2x32xf32> to vector<2x32xf32>
    %334 = vector.shape_cast %331 : vector<2x32xf32> to vector<1x2x32xf32>
    tpu.vector_store %arg4[%c0_57, %c0_58, %c0_59], %334 {strides = array<i32>} : memref<2x2x32xf32, #tpu.memory_space<vmem>>, vector<1x2x32xf32>,
    %335 = vector.extract_strided_slice %324 {offsets = [0, 0], sizes = [2, 32], strides = [1, 1]} : vector<8x32xf32> to vector<2x32xf32>
    %c1 = arith.constant 1 : index
    %c0_60 = arith.constant 0 : index
    %c0_61 = arith.constant 0 : index
    %336 = vector.load %arg3[%c1, %c0_60, %c0_61] : memref<2x2x32xf32, #tpu.memory_space<vmem>>, vector<1x2x32xf32>
    %337 = vector.shape_cast %336 : vector<1x2x32xf32> to vector<2x32xf32>
    %338 = vector.shape_cast %335 : vector<2x32xf32> to vector<1x2x32xf32>
    tpu.vector_store %arg3[%c1, %c0_60, %c0_61], %338 {strides = array<i32>} : memref<2x2x32xf32, #tpu.memory_space<vmem>>, vector<1x2x32xf32>,
    %339 = vector.extract_strided_slice %322 {offsets = [0, 0], sizes = [2, 32], strides = [1, 1]} : vector<8x32xf32> to vector<2x32xf32>
    %c1_62 = arith.constant 1 : index
    %c0_63 = arith.constant 0 : index
    %c0_64 = arith.constant 0 : index
    %340 = vector.load %arg4[%c1_62, %c0_63, %c0_64] : memref<2x2x32xf32, #tpu.memory_space<vmem>>, vector<1x2x32xf32>
    %341 = vector.shape_cast %340 : vector<1x2x32xf32> to vector<2x32xf32>
    %342 = vector.shape_cast %339 : vector<2x32xf32> to vector<1x2x32xf32>
    tpu.vector_store %arg4[%c1_62, %c0_63, %c0_64], %342 {strides = array<i32>} : memref<2x2x32xf32, #tpu.memory_space<vmem>>, vector<1x2x32xf32>,
    return
  }
}

</mosaic_0001>

<llo_original>
// kernel: lstm_encoder_forward.1
$region0: #{lstm_encoder_forward.1}
  #allocation0 [shape = 'u32[]', space=smem, size = 0x4, offset = 0x4, fixed_abs, tag = 'smem constant byte address 0x4 - core index']
  #allocation1 [shape = 'u32[144,128]{1,0:T(1,128)}', space=vmem, size = 0x12000, scoped, tag = 'internal scratch']
  %s0 = inlined_call_operand.vmem [shape: s32[64,1], index: 0, kind: input, shape index: {}]
  %s1 = inlined_call_operand.hbm [shape: f32[168,128], index: 1, kind: input, shape index: {}]
  %s2 = inlined_call_operand.vmem [shape: f32[2,256], index: 2, kind: output, shape index: {0}]
  %s3 = inlined_call_operand.hbm [shape: f32[2,2,32], index: 3, kind: output, shape index: {1}]
  %s4 = inlined_call_operand.hbm [shape: f32[2,2,32], index: 4, kind: output, shape index: {2}]
  %5 = xla_tuple %s2, %s3, %s4
  %s6 = sld [smem:[#allocation0]]
  $region38: #{lstm_encoder_forward.1} parent=0
    _
  %s8 = ssub.s32 1, %s6
  %s9 = scalar_select 0, %s8, %s6
  $region1: #{lstm_encoder_forward.1} parent=0
    #allocation2 [shape = 'u8[86016]{0}', space=vmem, size = 0x15000, scoped, tag = 'input window, operand 1, single buffered']
    #allocation3 [shape = 's32[1]{0}', space=sflag, size = 0x4, scoped, tag = 'scoped memory for lstm_encoder_forward.1']
    #allocation4 [shape = 's32[1]{0}', space=sflag, size = 0x4, scoped, tag = 'scoped memory for lstm_encoder_forward.1']
    #allocation5 [shape = 'u8[2048]{0}', space=vmem, size = 0x800, scoped, tag = 'output window, operand 1, single buffered']
    #allocation6 [shape = 'u8[2048]{0}', space=vmem, size = 0x800, scoped, tag = 'output window, operand 2, single buffered']
    #allocation7 [shape = 's32[1]{0}', space=sflag, size = 0x4, scoped, tag = 'scoped memory for lstm_encoder_forward.1']
    %10 = vsyncpa [#allocation3], 0
    %11 = vsyncpa [#allocation4], 0
    %12 = vsyncpa [#allocation7], 0
    // Predicated region
    $region2: #{lstm_encoder_forward.1} parent=1 // pred_check
      _
    $region3: #{lstm_encoder_forward.1} parent=1 // pred_check_branch
      %14 = sbr.rel (0) target = $region5
    $region4: #{lstm_encoder_forward.1} parent=1 // pred_region
      _
    $region5: #{lstm_encoder_forward.1} parent=1 // pred_fallthru
      _
    // Predicated region
    $region6: #{lstm_encoder_forward.1} parent=1 // pred_check
      _
    $region7: #{lstm_encoder_forward.1} parent=1 // pred_check_branch
      %16 = sbr.rel (0) target = $region9
    $region8: #{lstm_encoder_forward.1} parent=1 // pred_region
      %s18 = ssub.s32 2688, 2688
      %19 = vsyncadd [#allocation3], %s18
      %s20 = sshll.u32 [#allocation2], 4
      %s21 = int_to_ptr.vmem [resolvable:$true] %s20
      %26 = dma.hbm_to_vmem [thread:$0]  %s1, 2688, %s21, [#allocation3], 128, 128, 8
    $region9: #{lstm_encoder_forward.1} parent=1 // pred_fallthru
      _
    // Predicated region
    $region10: #{lstm_encoder_forward.1} parent=1 // pred_check
      _
    $region11: #{lstm_encoder_forward.1} parent=1 // pred_check_branch
      %28 = sbr.rel (0) target = $region13
    $region12: #{lstm_encoder_forward.1} parent=1 // pred_region
      %29 = dma.done [#allocation3], 2688
    $region13: #{lstm_encoder_forward.1} parent=1 // pred_fallthru
      _
    %v30 = vld [vmem:[%s0] sm:$0xff]
    %v31 = vld [vmem:[%s0 + $0x8] sm:$0xff]
    %v32 = vld [vmem:[%s0 + $0x10] sm:$0xff]
    %v33 = vld [vmem:[%s0 + $0x18] sm:$0xff]
    %v34 = vld [vmem:[%s0 + $0x20] sm:$0xff]
    %v35 = vld [vmem:[%s0 + $0x28] sm:$0xff]
    %v36 = vld [vmem:[%s0 + $0x30] sm:$0xff]
    %v37 = vld [vmem:[%s0 + $0x38] sm:$0xff]
    %v38 = vlaneseq
    %v39 = vand.u32 %v38, 127
    %40 = vset.pattern.permute.xlu0 0
    %41 = vperm.xlu0 %40, %v30
    %v42 = vpop.permute.xlu0 %41
    %43 = vset.pattern.permute.xlu0 0
    %44 = vperm.xlu0 %43, %v31
    %v45 = vpop.permute.xlu0 %44
    %46 = vset.pattern.permute.xlu0 0
    %47 = vperm.xlu0 %46, %v32
    %v48 = vpop.permute.xlu0 %47
    %49 = vset.pattern.permute.xlu0 0
    %50 = vperm.xlu0 %49, %v33
    %v51 = vpop.permute.xlu0 %50
    %52 = vset.pattern.permute.xlu0 0
    %53 = vperm.xlu0 %52, %v34
    %v54 = vpop.permute.xlu0 %53
    %55 = vset.pattern.permute.xlu0 0
    %56 = vperm.xlu0 %55, %v35
    %v57 = vpop.permute.xlu0 %56
    %58 = vset.pattern.permute.xlu0 0
    %59 = vperm.xlu0 %58, %v36
    %v60 = vpop.permute.xlu0 %59
    %61 = vset.pattern.permute.xlu0 0
    %62 = vperm.xlu0 %61, %v37
    %v63 = vpop.permute.xlu0 %62
    %vm64 = vcmp.eq.s32.totalorder %v42, %v39
    %vm65 = vcmp.eq.s32.totalorder %v45, %v39
    %vm66 = vcmp.eq.s32.totalorder %v48, %v39
    %vm67 = vcmp.eq.s32.totalorder %v51, %v39
    %vm68 = vcmp.eq.s32.totalorder %v54, %v39
    %vm69 = vcmp.eq.s32.totalorder %v57, %v39
    %vm70 = vcmp.eq.s32.totalorder %v60, %v39
    %vm71 = vcmp.eq.s32.totalorder %v63, %v39
    %v72 = vsel %vm64, 1, 0
    %v73 = vsel %vm65, 1, 0
    %v74 = vsel %vm66, 1, 0
    %v75 = vsel %vm67, 1, 0
    %v76 = vsel %vm68, 1, 0
    %v77 = vsel %vm69, 1, 0
    %v78 = vsel %vm70, 1, 0
    %v79 = vsel %vm71, 1, 0
    %v80 = vcvt.s32.f32 %v72
    %v81 = vcvt.s32.f32 %v73
    %v82 = vcvt.s32.f32 %v74
    %v83 = vcvt.s32.f32 %v75
    %v84 = vcvt.s32.f32 %v76
    %v85 = vcvt.s32.f32 %v77
    %v86 = vcvt.s32.f32 %v78
    %v87 = vcvt.s32.f32 %v79
    %v88 = vld [vmem:[#allocation2] sm:$0xff]
    %v89 = vld [vmem:[#allocation2 + $0x8] sm:$0xff]
    %v90 = vld [vmem:[#allocation2 + $0x10] sm:$0xff]
    %v91 = vld [vmem:[#allocation2 + $0x18] sm:$0xff]
    %v92 = vld [vmem:[#allocation2 + $0x20] sm:$0xff]
    %v93 = vld [vmem:[#allocation2 + $0x28] sm:$0xff]
    %v94 = vld [vmem:[#allocation2 + $0x30] sm:$0xff]
    %v95 = vld [vmem:[#allocation2 + $0x38] sm:$0xff]
    %vm96 = vcmask 523264
    %v98 = vsel %vm96, %v80, 0
    %v101 = vsel %vm96, %v81, 0
    %v104 = vsel %vm96, %v82, 0
    %v107 = vsel %vm96, %v83, 0
    %v110 = vsel %vm96, %v84, 0
    %v113 = vsel %vm96, %v85, 0
    %v116 = vsel %vm96, %v86, 0
    %v119 = vsel %vm96, %v87, 0
    %121 = vmatprep.subr.mxu0 0.0
    %122 = vmatpush1.msra.mxu0 %v88
    %123 = vmatprep.subr.mxu0 0.0
    %124 = vmatpush1.msra.mxu0 %v89
    %125 = vmatprep.subr.mxu0 0.0
    %126 = vmatpush1.msra.mxu0 %v90
    %127 = vmatprep.subr.mxu0 0.0
    %128 = vmatpush1.msra.mxu0 %v91
    %129 = vmatprep.subr.mxu0 0.0
    %130 = vmatpush1.msra.mxu0 %v92
    %131 = vmatprep.subr.mxu0 0.0
    %132 = vmatpush1.msra.mxu0 %v93
    %133 = vmatprep.subr.mxu0 0.0
    %134 = vmatpush1.msra.mxu0 %v94
    %135 = vmatprep.subr.mxu0 0.0
    %136 = vmatpush1.msra.mxu0 %v95
    %137 = vmatprep.subr.mxu0 0.0
    %138 = vmatpush1.msra.mxu0 0.0
    %139 = vmatprep.subr.mxu0 0.0
    %140 = vmatpush1.msra.mxu0 0.0
    %141 = vmatprep.subr.mxu0 0.0
    %142 = vmatpush1.msra.mxu0 0.0
    %143 = vmatprep.subr.mxu0 0.0
    %144 = vmatpush1.msra.mxu0 0.0
    %145 = vmatprep.subr.mxu0 0.0
    %146 = vmatpush1.msra.mxu0 0.0
    %147 = vmatprep.subr.mxu0 0.0
    %148 = vmatpush1.msra.mxu0 0.0
    %149 = vmatprep.subr.mxu0 0.0
    %150 = vmatpush1.msra.mxu0 0.0
    %151 = vmatprep.subr.mxu0 0.0
    %152 = vmatpush1.msra.mxu0 0.0
    %153 = vmatprep.subr.mxu0 0.0
    %154 = vmatpush1.msra.mxu0 0.0
    %155 = vmatprep.subr.mxu0 0.0
    %156 = vmatpush1.msra.mxu0 0.0
    %157 = vmatprep.subr.mxu0 0.0
    %158 = vmatpush1.msra.mxu0 0.0
    %159 = vmatprep.subr.mxu0 0.0
    %160 = vmatpush1.msra.mxu0 0.0
    %161 = vmatprep.subr.mxu0 0.0
    %162 = vmatpush1.msra.mxu0 0.0
    %163 = vmatprep.subr.mxu0 0.0
    %164 = vmatpush1.msra.mxu0 0.0
    %165 = vmatprep.subr.mxu0 0.0
    %166 = vmatpush1.msra.mxu0 0.0
    %167 = vmatprep.subr.mxu0 0.0
    %168 = vmatpush1.msra.mxu0 0.0
    %169 = vmatprep.subr.mxu0 0.0
    %170 = vmatpush1.msra.mxu0 0.0
    %171 = vmatprep.subr.mxu0 0.0
    %172 = vmatpush1.msra.mxu0 0.0
    %173 = vmatprep.subr.mxu0 0.0
    %174 = vmatpush1.msra.mxu0 0.0
    %175 = vmatprep.subr.mxu0 0.0
    %176 = vmatpush1.msra.mxu0 0.0
    %177 = vmatprep.subr.mxu0 0.0
    %178 = vmatpush1.msra.mxu0 0.0
    %179 = vmatprep.subr.mxu0 0.0
    %180 = vmatpush1.msra.mxu0 0.0
    %181 = vmatprep.subr.mxu0 0.0
    %182 = vmatpush1.msra.mxu0 0.0
    %183 = vmatprep.subr.mxu0 0.0
    %184 = vmatpush1.msra.mxu0 0.0
    %185 = vmatprep.mubr.f32.mxu0 0.0
    %186 = vmatmul.mubr.f32.gmra.mrb[0].mxu0 %v98
    %v187 = vpop.f32.mrb[0].mxu0
    %v188 = vadd.f32 0.0, %v187
    %v189 = vpop.f32.mrb[0].mxu0
    %190 = vmatprep.mubr.f32.mxu0 0.0
    %191 = vmatmul.mubr.f32.gmra.mrb[0].mxu0 %v101
    %v192 = vpop.f32.mrb[0].mxu0
    %v193 = vadd.f32 0.0, %v192
    %v194 = vpop.f32.mrb[0].mxu0
    %195 = vmatprep.mubr.f32.mxu0 0.0
    %196 = vmatmul.mubr.f32.gmra.mrb[0].mxu0 %v104
    %v197 = vpop.f32.mrb[0].mxu0
    %v198 = vadd.f32 0.0, %v197
    %v199 = vpop.f32.mrb[0].mxu0
    %200 = vmatprep.mubr.f32.mxu0 0.0
    %201 = vmatmul.mubr.f32.gmra.mrb[0].mxu0 %v107
    %v202 = vpop.f32.mrb[0].mxu0
    %v203 = vadd.f32 0.0, %v202
    %v204 = vpop.f32.mrb[0].mxu0
    %205 = vmatprep.mubr.f32.mxu0 0.0
    %206 = vmatmul.mubr.f32.gmra.mrb[0].mxu0 %v110
    %v207 = vpop.f32.mrb[0].mxu0
    %v208 = vadd.f32 0.0, %v207
    %v209 = vpop.f32.mrb[0].mxu0
    %210 = vmatprep.mubr.f32.mxu0 0.0
    %211 = vmatmul.mubr.f32.gmra.mrb[0].mxu0 %v113
    %v212 = vpop.f32.mrb[0].mxu0
    %v213 = vadd.f32 0.0, %v212
    %v214 = vpop.f32.mrb[0].mxu0
    %215 = vmatprep.mubr.f32.mxu0 0.0
    %216 = vmatmul.mubr.f32.gmra.mrb[0].mxu0 %v116
    %v217 = vpop.f32.mrb[0].mxu0
    %v218 = vadd.f32 0.0, %v217
    %v219 = vpop.f32.mrb[0].mxu0
    %220 = vmatprep.mubr.f32.mxu0 0.0
    %221 = vmatmul.mubr.f32.gmra.mrb[0].mxu0 %v119
    %v222 = vpop.f32.mrb[0].mxu0
    %v223 = vadd.f32 0.0, %v222
    %v224 = vpop.f32.mrb[0].mxu0
    %225 = vdwg.mxu0
    %v226 = vld [vmem:[#allocation2 + $0x40] sm:$0xff]
    %v227 = vld [vmem:[#allocation2 + $0x48] sm:$0xff]
    %v228 = vld [vmem:[#allocation2 + $0x50] sm:$0xff]
    %v229 = vld [vmem:[#allocation2 + $0x58] sm:$0xff]
    %v230 = vld [vmem:[#allocation2 + $0x60] sm:$0xff]
    %v231 = vld [vmem:[#allocation2 + $0x68] sm:$0xff]
    %v232 = vld [vmem:[#allocation2 + $0x70] sm:$0xff]
    %v233 = vld [vmem:[#allocation2 + $0x78] sm:$0xff]
    %v234 = vld [vmem:[#allocation2 + $0x80] sm:$0xff]
    %v235 = vld [vmem:[#allocation2 + $0x88] sm:$0xff]
    %v236 = vld [vmem:[#allocation2 + $0x90] sm:$0xff]
    %v237 = vld [vmem:[#allocation2 + $0x98] sm:$0xff]
    %v238 = vld [vmem:[#allocation2 + $0xa0] sm:$0x1]
    %vm239 = vcmask 261120
    %v241 = vsel %vm239, 0.0, 0
    %243 = vmatprep.subr.mxu0 0.0
    %244 = vmatpush1.msra.mxu0 %v226
    %245 = vmatprep.subr.mxu0 0.0
    %246 = vmatpush1.msra.mxu0 %v227
    %247 = vmatprep.subr.mxu0 0.0
    %248 = vmatpush1.msra.mxu0 %v228
    %249 = vmatprep.subr.mxu0 0.0
    %250 = vmatpush1.msra.mxu0 %v229
    %251 = vmatprep.subr.mxu0 0.0
    %252 = vmatpush1.msra.mxu0 0.0
    %253 = vmatprep.subr.mxu0 0.0
    %254 = vmatpush1.msra.mxu0 0.0
    %255 = vmatprep.subr.mxu0 0.0
    %256 = vmatpush1.msra.mxu0 0.0
    %257 = vmatprep.subr.mxu0 0.0
    %258 = vmatpush1.msra.mxu0 0.0
    %259 = vmatprep.subr.mxu0 0.0
    %260 = vmatpush1.msra.mxu0 0.0
    %261 = vmatprep.subr.mxu0 0.0
    %262 = vmatpush1.msra.mxu0 0.0
    %263 = vmatprep.subr.mxu0 0.0
    %264 = vmatpush1.msra.mxu0 0.0
    %265 = vmatprep.subr.mxu0 0.0
    %266 = vmatpush1.msra.mxu0 0.0
    %267 = vmatprep.subr.mxu0 0.0
    %268 = vmatpush1.msra.mxu0 0.0
    %269 = vmatprep.subr.mxu0 0.0
    %270 = vmatpush1.msra.mxu0 0.0
    %271 = vmatprep.subr.mxu0 0.0
    %272 = vmatpush1.msra.mxu0 0.0
    %273 = vmatprep.subr.mxu0 0.0
    %274 = vmatpush1.msra.mxu0 0.0
    %275 = vmatprep.subr.mxu0 0.0
    %276 = vmatpush1.msra.mxu0 0.0
    %277 = vmatprep.subr.mxu0 0.0
    %278 = vmatpush1.msra.mxu0 0.0
    %279 = vmatprep.subr.mxu0 0.0
    %280 = vmatpush1.msra.mxu0 0.0
    %281 = vmatprep.subr.mxu0 0.0
    %282 = vmatpush1.msra.mxu0 0.0
    %283 = vmatprep.subr.mxu0 0.0
    %284 = vmatpush1.msra.mxu0 0.0
    %285 = vmatprep.subr.mxu0 0.0
    %286 = vmatpush1.msra.mxu0 0.0
    %287 = vmatprep.subr.mxu0 0.0
    %288 = vmatpush1.msra.mxu0 0.0
    %289 = vmatprep.subr.mxu0 0.0
    %290 = vmatpush1.msra.mxu0 0.0
    %291 = vmatprep.subr.mxu0 0.0
    %292 = vmatpush1.msra.mxu0 0.0
    %293 = vmatprep.subr.mxu0 0.0
    %294 = vmatpush1.msra.mxu0 0.0
    %295 = vmatprep.subr.mxu0 0.0
    %296 = vmatpush1.msra.mxu0 0.0
    %297 = vmatprep.subr.mxu0 0.0
    %298 = vmatpush1.msra.mxu0 0.0
    %299 = vmatprep.subr.mxu0 0.0
    %300 = vmatpush1.msra.mxu0 0.0
    %301 = vmatprep.subr.mxu0 0.0
    %302 = vmatpush1.msra.mxu0 0.0
    %303 = vmatprep.subr.mxu0 0.0
    %304 = vmatpush1.msra.mxu0 0.0
    %305 = vmatprep.subr.mxu0 0.0
    %306 = vmatpush1.msra.mxu0 0.0
    %307 = vmatprep.mubr.f32.mxu0 0.0
    %308 = vmatmul.mubr.f32.gmra.mrb[0].mxu0 %v241
    %v309 = vpop.f32.mrb[0].mxu0
    %v310 = vadd.f32 0.0, %v309
    %v311 = vpop.f32.mrb[0].mxu0
    %312 = vdwg.mxu0
    %v313 = vadd.f32 %v188, %v310
    %v314 = vxor.u32 %v313, 2147483648
    %v315 = vmul.f32 %v314, 1.442695
    %v316 = vpow.pop %v315
    %v317 = vadd.f32 %v316, 1.0
    %v318 = vrcp.pop %v317
    %v319 = vmul.f32 1.0, %v318
    %v320 = vtanh.pop %v313
    %v321 = vmul.f32 %v319, 0.0
    %323 = vrot.lane.b32.xlu0 %v320, 64
    %v324 = vpop.permute.xlu0 %323
    %v326 = vmul.f32 %v319, %v324
    %328 = vrot.lane.b32.xlu0 %v326, 32
    %v329 = vpop.permute.xlu0 %328
    %v331 = vadd.f32 %v321, %v329
    %v332 = vtanh.pop %v331
    %334 = vrot.lane.b32.xlu0 %v332, 64
    %v335 = vpop.permute.xlu0 %334
    %v337 = vmul.f32 %v319, %v335
    %339 = vrot.lane.b32.xlu0 %v337, 32
    %v340 = vpop.permute.xlu0 %339
    %v341 = vsel %vm239, %v340, 0
    %343 = vmatprep.subr.mxu0 0.0
    %344 = vmatpush1.msra.mxu0 %v226
    %345 = vmatprep.subr.mxu0 0.0
    %346 = vmatpush1.msra.mxu0 %v227
    %347 = vmatprep.subr.mxu0 0.0
    %348 = vmatpush1.msra.mxu0 %v228
    %349 = vmatprep.subr.mxu0 0.0
    %350 = vmatpush1.msra.mxu0 %v229
    %351 = vmatprep.subr.mxu0 0.0
    %352 = vmatpush1.msra.mxu0 0.0
    %353 = vmatprep.subr.mxu0 0.0
    %354 = vmatpush1.msra.mxu0 0.0
    %355 = vmatprep.subr.mxu0 0.0
    %356 = vmatpush1.msra.mxu0 0.0
    %357 = vmatprep.subr.mxu0 0.0
    %358 = vmatpush1.msra.mxu0 0.0
    %359 = vmatprep.subr.mxu0 0.0
    %360 = vmatpush1.msra.mxu0 0.0
    %361 = vmatprep.subr.mxu0 0.0
    %362 = vmatpush1.msra.mxu0 0.0
    %363 = vmatprep.subr.mxu0 0.0
    %364 = vmatpush1.msra.mxu0 0.0
    %365 = vmatprep.subr.mxu0 0.0
    %366 = vmatpush1.msra.mxu0 0.0
    %367 = vmatprep.subr.mxu0 0.0
    %368 = vmatpush1.msra.mxu0 0.0
    %369 = vmatprep.subr.mxu0 0.0
    %370 = vmatpush1.msra.mxu0 0.0
    %371 = vmatprep.subr.mxu0 0.0
    %372 = vmatpush1.msra.mxu0 0.0
    %373 = vmatprep.subr.mxu0 0.0
    %374 = vmatpush1.msra.mxu0 0.0
    %375 = vmatprep.subr.mxu0 0.0
    %376 = vmatpush1.msra.mxu0 0.0
    %377 = vmatprep.subr.mxu0 0.0
    %378 = vmatpush1.msra.mxu0 0.0
    %379 = vmatprep.subr.mxu0 0.0
    %380 = vmatpush1.msra.mxu0 0.0
    %381 = vmatprep.subr.mxu0 0.0
    %382 = vmatpush1.msra.mxu0 0.0
    %383 = vmatprep.subr.mxu0 0.0
    %384 = vmatpush1.msra.mxu0 0.0
    %385 = vmatprep.subr.mxu0 0.0
    %386 = vmatpush1.msra.mxu0 0.0
    %387 = vmatprep.subr.mxu0 0.0
    %388 = vmatpush1.msra.mxu0 0.0
    %389 = vmatprep.subr.mxu0 0.0
    %390 = vmatpush1.msra.mxu0 0.0
    %391 = vmatprep.subr.mxu0 0.0
    %392 = vmatpush1.msra.mxu0 0.0
    %393 = vmatprep.subr.mxu0 0.0
    %394 = vmatpush1.msra.mxu0 0.0
    %395 = vmatprep.subr.mxu0 0.0
    %396 = vmatpush1.msra.mxu0 0.0
    %397 = vmatprep.subr.mxu0 0.0
    %398 = vmatpush1.msra.mxu0 0.0
    %399 = vmatprep.subr.mxu0 0.0
    %400 = vmatpush1.msra.mxu0 0.0
    %401 = vmatprep.subr.mxu0 0.0
    %402 = vmatpush1.msra.mxu0 0.0
    %403 = vmatprep.subr.mxu0 0.0
    %404 = vmatpush1.msra.mxu0 0.0
    %405 = vmatprep.subr.mxu0 0.0
    %406 = vmatpush1.msra.mxu0 0.0
    %407 = vmatprep.mubr.f32.mxu0 0.0
    %408 = vmatmul.mubr.f32.gmra.mrb[0].mxu0 %v341
    %v409 = vpop.f32.mrb[0].mxu0
    %v410 = vadd.f32 0.0, %v409
    %v411 = vpop.f32.mrb[0].mxu0
    %412 = vdwg.mxu0
    %v413 = vadd.f32 %v193, %v410
    %v414 = vxor.u32 %v413, 2147483648
    %v415 = vmul.f32 %v414, 1.442695
    %v416 = vpow.pop %v415
    %v417 = vadd.f32 %v416, 1.0
    %v418 = vrcp.pop %v417
    %v419 = vmul.f32 1.0, %v418
    %v420 = vtanh.pop %v413
    %v421 = vmul.f32 %v419, %v331
    %423 = vrot.lane.b32.xlu0 %v420, 64
    %v424 = vpop.permute.xlu0 %423
    %v426 = vmul.f32 %v419, %v424
    %428 = vrot.lane.b32.xlu0 %v426, 32
    %v429 = vpop.permute.xlu0 %428
    %v431 = vadd.f32 %v421, %v429
    %v432 = vtanh.pop %v431
    %434 = vrot.lane.b32.xlu0 %v432, 64
    %v435 = vpop.permute.xlu0 %434
    %v437 = vmul.f32 %v419, %v435
    %v439 = vsel %vm239, %v340, 0.0
    %v440 = vlaneseq
    %v441 = vshrl.u32 %v440, 7
    %v442 = vsub.s32 0, %v441
    %v443 = vrot.slane %v238, %v442
    %v445 = vsel %vm96, %v439, 0
    %447 = vmatprep.subr.mxu0 0.0
    %448 = vmatpush1.msra.mxu0 %v230
    %449 = vmatprep.subr.mxu0 0.0
    %450 = vmatpush1.msra.mxu0 %v231
    %451 = vmatprep.subr.mxu0 0.0
    %452 = vmatpush1.msra.mxu0 %v232
    %453 = vmatprep.subr.mxu0 0.0
    %454 = vmatpush1.msra.mxu0 %v233
    %455 = vmatprep.subr.mxu0 0.0
    %456 = vmatpush1.msra.mxu0 %v234
    %457 = vmatprep.subr.mxu0 0.0
    %458 = vmatpush1.msra.mxu0 %v235
    %459 = vmatprep.subr.mxu0 0.0
    %460 = vmatpush1.msra.mxu0 %v236
    %461 = vmatprep.subr.mxu0 0.0
    %462 = vmatpush1.msra.mxu0 %v237
    %463 = vmatprep.subr.mxu0 0.0
    %464 = vmatpush1.msra.mxu0 0.0
    %465 = vmatprep.subr.mxu0 0.0
    %466 = vmatpush1.msra.mxu0 0.0
    %467 = vmatprep.subr.mxu0 0.0
    %468 = vmatpush1.msra.mxu0 0.0
    %469 = vmatprep.subr.mxu0 0.0
    %470 = vmatpush1.msra.mxu0 0.0
    %471 = vmatprep.subr.mxu0 0.0
    %472 = vmatpush1.msra.mxu0 0.0
    %473 = vmatprep.subr.mxu0 0.0
    %474 = vmatpush1.msra.mxu0 0.0
    %475 = vmatprep.subr.mxu0 0.0
    %476 = vmatpush1.msra.mxu0 0.0
    %477 = vmatprep.subr.mxu0 0.0
    %478 = vmatpush1.msra.mxu0 0.0
    %479 = vmatprep.subr.mxu0 0.0
    %480 = vmatpush1.msra.mxu0 0.0
    %481 = vmatprep.subr.mxu0 0.0
    %482 = vmatpush1.msra.mxu0 0.0
    %483 = vmatprep.subr.mxu0 0.0
    %484 = vmatpush1.msra.mxu0 0.0
    %485 = vmatprep.subr.mxu0 0.0
    %486 = vmatpush1.msra.mxu0 0.0
    %487 = vmatprep.subr.mxu0 0.0
    %488 = vmatpush1.msra.mxu0 0.0
    %489 = vmatprep.subr.mxu0 0.0
    %490 = vmatpush1.msra.mxu0 0.0
    %491 = vmatprep.subr.mxu0 0.0
    %492 = vmatpush1.msra.mxu0 0.0
    %493 = vmatprep.subr.mxu0 0.0
    %494 = vmatpush1.msra.mxu0 0.0
    %495 = vmatprep.subr.mxu0 0.0
    %496 = vmatpush1.msra.mxu0 0.0
    %497 = vmatprep.subr.mxu0 0.0
    %498 = vmatpush1.msra.mxu0 0.0
    %499 = vmatprep.subr.mxu0 0.0
    %500 = vmatpush1.msra.mxu0 0.0
    %501 = vmatprep.subr.mxu0 0.0
    %502 = vmatpush1.msra.mxu0 0.0
    %503 = vmatprep.subr.mxu0 0.0
    %504 = vmatpush1.msra.mxu0 0.0
    %505 = vmatprep.subr.mxu0 0.0
    %506 = vmatpush1.msra.mxu0 0.0
    %507 = vmatprep.subr.mxu0 0.0
    %508 = vmatpush1.msra.mxu0 0.0
    %509 = vmatprep.subr.mxu0 0.0
    %510 = vmatpush1.msra.mxu0 0.0
    %511 = vmatprep.mubr.f32.mxu0 0.0
    %512 = vmatmul.mubr.f32.gmra.mrb[0].mxu0 %v445
    %v513 = vpop.f32.mrb[0].mxu0
    %v514 = vadd.f32 %v443, %v513
    %v515 = vpop.f32.mrb[0].mxu0
    %516 = vdwg.mxu0
    %v517 = vxor.u32 %v514, 2147483648
    %v518 = vmul.f32 %v517, 1.442695
    %v519 = vpow.pop %v518
    %v520 = vadd.f32 %v519, 1.0
    %v521 = vrcp.pop %v520
    %v522 = vmul.f32 1.0, %v521
    %v523 = vtanh.pop %v514
    %v524 = vmul.f32 %v522, 0.0
    %526 = vrot.lane.b32.xlu0 %v523, 64
    %v527 = vpop.permute.xlu0 %526
    %v529 = vmul.f32 %v522, %v527
    %531 = vrot.lane.b32.xlu0 %v529, 32
    %v532 = vpop.permute.xlu0 %531
    %v534 = vadd.f32 %v524, %v532
    %v535 = vtanh.pop %v534
    %537 = vrot.lane.b32.xlu0 %v535, 64
    %v538 = vpop.permute.xlu0 %537
    %v540 = vmul.f32 %v522, %v538
    %v543 = vunpack.c.l.s4 1983009808
    %v544 = vunpack.c.0.s8 %v543
    %v545 = vlaneseq
    %v546 = vshrl.u32 %v545, 7
    %v547 = vsub.s32 %v544, %v546
    %v548 = vrot.slane %v540, %v547
    %549 = vrot.lane.b32.xlu0 %v548, 32
    %v550 = vpop.permute.xlu0 %549
    %vm552 = vcmask 254976
    %553 = vst.msk [vmem:[%s2] sm:$0x3] %vm552, %v550
    %555 = vrot.lane.b32.xlu0 %v437, 32
    %v556 = vpop.permute.xlu0 %555
    %v557 = vsel %vm239, %v556, 0
    %559 = vmatprep.subr.mxu0 0.0
    %560 = vmatpush1.msra.mxu0 %v226
    %561 = vmatprep.subr.mxu0 0.0
    %562 = vmatpush1.msra.mxu0 %v227
    %563 = vmatprep.subr.mxu0 0.0
    %564 = vmatpush1.msra.mxu0 %v228
    %565 = vmatprep.subr.mxu0 0.0
    %566 = vmatpush1.msra.mxu0 %v229
    %567 = vmatprep.subr.mxu0 0.0
    %568 = vmatpush1.msra.mxu0 0.0
    %569 = vmatprep.subr.mxu0 0.0
    %570 = vmatpush1.msra.mxu0 0.0
    %571 = vmatprep.subr.mxu0 0.0
    %572 = vmatpush1.msra.mxu0 0.0
    %573 = vmatprep.subr.mxu0 0.0
    %574 = vmatpush1.msra.mxu0 0.0
    %575 = vmatprep.subr.mxu0 0.0
    %576 = vmatpush1.msra.mxu0 0.0
    %577 = vmatprep.subr.mxu0 0.0
    %578 = vmatpush1.msra.mxu0 0.0
    %579 = vmatprep.subr.mxu0 0.0
    %580 = vmatpush1.msra.mxu0 0.0
    %581 = vmatprep.subr.mxu0 0.0
    %582 = vmatpush1.msra.mxu0 0.0
    %583 = vmatprep.subr.mxu0 0.0
    %584 = vmatpush1.msra.mxu0 0.0
    %585 = vmatprep.subr.mxu0 0.0
    %586 = vmatpush1.msra.mxu0 0.0
    %587 = vmatprep.subr.mxu0 0.0
    %588 = vmatpush1.msra.mxu0 0.0
    %589 = vmatprep.subr.mxu0 0.0
    %590 = vmatpush1.msra.mxu0 0.0
    %591 = vmatprep.subr.mxu0 0.0
    %592 = vmatpush1.msra.mxu0 0.0
    %593 = vmatprep.subr.mxu0 0.0
    %594 = vmatpush1.msra.mxu0 0.0
    %595 = vmatprep.subr.mxu0 0.0
    %596 = vmatpush1.msra.mxu0 0.0
    %597 = vmatprep.subr.mxu0 0.0
    %598 = vmatpush1.msra.mxu0 0.0
    %599 = vmatprep.subr.mxu0 0.0
    %600 = vmatpush1.msra.mxu0 0.0
    %601 = vmatprep.subr.mxu0 0.0
    %602 = vmatpush1.msra.mxu0 0.0
    %603 = vmatprep.subr.mxu0 0.0
    %604 = vmatpush1.msra.mxu0 0.0
    %605 = vmatprep.subr.mxu0 0.0
    %606 = vmatpush1.msra.mxu0 0.0
    %607 = vmatprep.subr.mxu0 0.0
    %608 = vmatpush1.msra.mxu0 0.0
    %609 = vmatprep.subr.mxu0 0.0
    %610 = vmatpush1.msra.mxu0 0.0
    %611 = vmatprep.subr.mxu0 0.0
    %612 = vmatpush1.msra.mxu0 0.0
    %613 = vmatprep.subr.mxu0 0.0
    %614 = vmatpush1.msra.mxu0 0.0
    %615 = vmatprep.subr.mxu0 0.0
    %616 = vmatpush1.msra.mxu0 0.0
    %617 = vmatprep.subr.mxu0 0.0
    %618 = vmatpush1.msra.mxu0 0.0
    %619 = vmatprep.subr.mxu0 0.0
    %620 = vmatpush1.msra.mxu0 0.0
    %621 = vmatprep.subr.mxu0 0.0
    %622 = vmatpush1.msra.mxu0 0.0
    %623 = vmatprep.mubr.f32.mxu0 0.0
    %624 = vmatmul.mubr.f32.gmra.mrb[0].mxu0 %v557
    %v625 = vpop.f32.mrb[0].mxu0
    %v626 = vadd.f32 0.0, %v625
    %v627 = vpop.f32.mrb[0].mxu0
    %628 = vdwg.mxu0
    %v629 = vadd.f32 %v198, %v626
    %v630 = vxor.u32 %v629, 2147483648
    %v631 = vmul.f32 %v630, 1.442695
    %v632 = vpow.pop %v631
    %v633 = vadd.f32 %v632, 1.0
    %v634 = vrcp.pop %v633
    %v635 = vmul.f32 1.0, %v634
    %v636 = vtanh.pop %v629
    %v637 = vmul.f32 %v635, %v431
    %639 = vrot.lane.b32.xlu0 %v636, 64
    %v640 = vpop.permute.xlu0 %639
    %v642 = vmul.f32 %v635, %v640
    %644 = vrot.lane.b32.xlu0 %v642, 32
    %v645 = vpop.permute.xlu0 %644
    %v647 = vadd.f32 %v637, %v645
    %v648 = vtanh.pop %v647
    %650 = vrot.lane.b32.xlu0 %v648, 64
    %v651 = vpop.permute.xlu0 %650
    %v653 = vmul.f32 %v635, %v651
    %655 = vrot.lane.b32.xlu0 %v540, 64
    %v656 = vpop.permute.xlu0 %655
    %v658 = vsel %vm239, %v556, %v656
    %v660 = vsel %vm96, %v658, 0
    %662 = vmatprep.subr.mxu0 0.0
    %663 = vmatpush1.msra.mxu0 %v230
    %664 = vmatprep.subr.mxu0 0.0
    %665 = vmatpush1.msra.mxu0 %v231
    %666 = vmatprep.subr.mxu0 0.0
    %667 = vmatpush1.msra.mxu0 %v232
    %668 = vmatprep.subr.mxu0 0.0
    %669 = vmatpush1.msra.mxu0 %v233
    %670 = vmatprep.subr.mxu0 0.0
    %671 = vmatpush1.msra.mxu0 %v234
    %672 = vmatprep.subr.mxu0 0.0
    %673 = vmatpush1.msra.mxu0 %v235
    %674 = vmatprep.subr.mxu0 0.0
    %675 = vmatpush1.msra.mxu0 %v236
    %676 = vmatprep.subr.mxu0 0.0
    %677 = vmatpush1.msra.mxu0 %v237
    %678 = vmatprep.subr.mxu0 0.0
    %679 = vmatpush1.msra.mxu0 0.0
    %680 = vmatprep.subr.mxu0 0.0
    %681 = vmatpush1.msra.mxu0 0.0
    %682 = vmatprep.subr.mxu0 0.0
    %683 = vmatpush1.msra.mxu0 0.0
    %684 = vmatprep.subr.mxu0 0.0
    %685 = vmatpush1.msra.mxu0 0.0
    %686 = vmatprep.subr.mxu0 0.0
    %687 = vmatpush1.msra.mxu0 0.0
    %688 = vmatprep.subr.mxu0 0.0
    %689 = vmatpush1.msra.mxu0 0.0
    %690 = vmatprep.subr.mxu0 0.0
    %691 = vmatpush1.msra.mxu0 0.0
    %692 = vmatprep.subr.mxu0 0.0
    %693 = vmatpush1.msra.mxu0 0.0
    %694 = vmatprep.subr.mxu0 0.0
    %695 = vmatpush1.msra.mxu0 0.0
    %696 = vmatprep.subr.mxu0 0.0
    %697 = vmatpush1.msra.mxu0 0.0
    %698 = vmatprep.subr.mxu0 0.0
    %699 = vmatpush1.msra.mxu0 0.0
    %700 = vmatprep.subr.mxu0 0.0
    %701 = vmatpush1.msra.mxu0 0.0
    %702 = vmatprep.subr.mxu0 0.0
    %703 = vmatpush1.msra.mxu0 0.0
    %704 = vmatprep.subr.mxu0 0.0
    %705 = vmatpush1.msra.mxu0 0.0
    %706 = vmatprep.subr.mxu0 0.0
    %707 = vmatpush1.msra.mxu0 0.0
    %708 = vmatprep.subr.mxu0 0.0
    %709 = vmatpush1.msra.mxu0 0.0
    %710 = vmatprep.subr.mxu0 0.0
    %711 = vmatpush1.msra.mxu0 0.0
    %712 = vmatprep.subr.mxu0 0.0
    %713 = vmatpush1.msra.mxu0 0.0
    %714 = vmatprep.subr.mxu0 0.0
    %715 = vmatpush1.msra.mxu0 0.0
    %716 = vmatprep.subr.mxu0 0.0
    %717 = vmatpush1.msra.mxu0 0.0
    %718 = vmatprep.subr.mxu0 0.0
    %719 = vmatpush1.msra.mxu0 0.0
    %720 = vmatprep.subr.mxu0 0.0
    %721 = vmatpush1.msra.mxu0 0.0
    %722 = vmatprep.subr.mxu0 0.0
    %723 = vmatpush1.msra.mxu0 0.0
    %724 = vmatprep.subr.mxu0 0.0
    %725 = vmatpush1.msra.mxu0 0.0
    %726 = vmatprep.mubr.f32.mxu0 0.0
    %727 = vmatmul.mubr.f32.gmra.mrb[0].mxu0 %v660
    %v728 = vpop.f32.mrb[0].mxu0
    %v729 = vadd.f32 %v443, %v728
    %v730 = vpop.f32.mrb[0].mxu0
    %731 = vdwg.mxu0
    %v732 = vxor.u32 %v729, 2147483648
    %v733 = vmul.f32 %v732, 1.442695
    %v734 = vpow.pop %v733
    %v735 = vadd.f32 %v734, 1.0
    %v736 = vrcp.pop %v735
    %v737 = vmul.f32 1.0, %v736
    %v738 = vtanh.pop %v729
    %v739 = vmul.f32 %v737, %v534
    %741 = vrot.lane.b32.xlu0 %v738, 64
    %v742 = vpop.permute.xlu0 %741
    %v744 = vmul.f32 %v737, %v742
    %746 = vrot.lane.b32.xlu0 %v744, 32
    %v747 = vpop.permute.xlu0 %746
    %v749 = vadd.f32 %v739, %v747
    %v750 = vtanh.pop %v749
    %752 = vrot.lane.b32.xlu0 %v750, 64
    %v753 = vpop.permute.xlu0 %752
    %v755 = vmul.f32 %v737, %v753
    %v758 = vunpack.c.l.s4 1983009808
    %v759 = vunpack.c.0.s8 %v758
    %v760 = vlaneseq
    %v761 = vshrl.u32 %v760, 7
    %v762 = vsub.s32 %v759, %v761
    %v763 = vrot.slane %v755, %v762
    %764 = vrot.lane.b32.xlu0 %v763, 64
    %v765 = vpop.permute.xlu0 %764
    %vm767 = vcmask 517376
    %768 = vst.msk [vmem:[%s2] sm:$0x3] %vm767, %v765
    %770 = vrot.lane.b32.xlu0 %v653, 32
    %v771 = vpop.permute.xlu0 %770
    %v772 = vsel %vm239, %v771, 0
    %774 = vmatprep.subr.mxu0 0.0
    %775 = vmatpush1.msra.mxu0 %v226
    %776 = vmatprep.subr.mxu0 0.0
    %777 = vmatpush1.msra.mxu0 %v227
    %778 = vmatprep.subr.mxu0 0.0
    %779 = vmatpush1.msra.mxu0 %v228
    %780 = vmatprep.subr.mxu0 0.0
    %781 = vmatpush1.msra.mxu0 %v229
    %782 = vmatprep.subr.mxu0 0.0
    %783 = vmatpush1.msra.mxu0 0.0
    %784 = vmatprep.subr.mxu0 0.0
    %785 = vmatpush1.msra.mxu0 0.0
    %786 = vmatprep.subr.mxu0 0.0
    %787 = vmatpush1.msra.mxu0 0.0
    %788 = vmatprep.subr.mxu0 0.0
    %789 = vmatpush1.msra.mxu0 0.0
    %790 = vmatprep.subr.mxu0 0.0
    %791 = vmatpush1.msra.mxu0 0.0
    %792 = vmatprep.subr.mxu0 0.0
    %793 = vmatpush1.msra.mxu0 0.0
    %794 = vmatprep.subr.mxu0 0.0
    %795 = vmatpush1.msra.mxu0 0.0
    %796 = vmatprep.subr.mxu0 0.0
    %797 = vmatpush1.msra.mxu0 0.0
    %798 = vmatprep.subr.mxu0 0.0
    %799 = vmatpush1.msra.mxu0 0.0
    %800 = vmatprep.subr.mxu0 0.0
    %801 = vmatpush1.msra.mxu0 0.0
    %802 = vmatprep.subr.mxu0 0.0
    %803 = vmatpush1.msra.mxu0 0.0
    %804 = vmatprep.subr.mxu0 0.0
    %805 = vmatpush1.msra.mxu0 0.0
    %806 = vmatprep.subr.mxu0 0.0
    %807 = vmatpush1.msra.mxu0 0.0
    %808 = vmatprep.subr.mxu0 0.0
    %809 = vmatpush1.msra.mxu0 0.0
    %810 = vmatprep.subr.mxu0 0.0
    %811 = vmatpush1.msra.mxu0 0.0
    %812 = vmatprep.subr.mxu0 0.0
    %813 = vmatpush1.msra.mxu0 0.0
    %814 = vmatprep.subr.mxu0 0.0
    %815 = vmatpush1.msra.mxu0 0.0
    %816 = vmatprep.subr.mxu0 0.0
    %817 = vmatpush1.msra.mxu0 0.0
    %818 = vmatprep.subr.mxu0 0.0
    %819 = vmatpush1.msra.mxu0 0.0
    %820 = vmatprep.subr.mxu0 0.0
    %821 = vmatpush1.msra.mxu0 0.0
    %822 = vmatprep.subr.mxu0 0.0
    %823 = vmatpush1.msra.mxu0 0.0
    %824 = vmatprep.subr.mxu0 0.0
    %825 = vmatpush1.msra.mxu0 0.0
    %826 = vmatprep.subr.mxu0 0.0
    %827 = vmatpush1.msra.mxu0 0.0
    %828 = vmatprep.subr.mxu0 0.0
    %829 = vmatpush1.msra.mxu0 0.0
    %830 = vmatprep.subr.mxu0 0.0
    %831 = vmatpush1.msra.mxu0 0.0
    %832 = vmatprep.subr.mxu0 0.0
    %833 = vmatpush1.msra.mxu0 0.0
    %834 = vmatprep.subr.mxu0 0.0
    %835 = vmatpush1.msra.mxu0 0.0
    %836 = vmatprep.subr.mxu0 0.0
    %837 = vmatpush1.msra.mxu0 0.0
    %838 = vmatprep.mubr.f32.mxu0 0.0
    %839 = vmatmul.mubr.f32.gmra.mrb[0].mxu0 %v772
    %v840 = vpop.f32.mrb[0].mxu0
    %v841 = vadd.f32 0.0, %v840
    %v842 = vpop.f32.mrb[0].mxu0
    %843 = vdwg.mxu0
    %v844 = vadd.f32 %v203, %v841
    %v845 = vxor.u32 %v844, 2147483648
    %v846 = vmul.f32 %v845, 1.442695
    %v847 = vpow.pop %v846
    %v848 = vadd.f32 %v847, 1.0
    %v849 = vrcp.pop %v848
    %v850 = vmul.f32 1.0, %v849
    %v851 = vtanh.pop %v844
    %v852 = vmul.f32 %v850, %v647
    %854 = vrot.lane.b32.xlu0 %v851, 64
    %v855 = vpop.permute.xlu0 %854
    %v857 = vmul.f32 %v850, %v855
    %859 = vrot.lane.b32.xlu0 %v857, 32
    %v860 = vpop.permute.xlu0 %859
    %v862 = vadd.f32 %v852, %v860
    %v863 = vtanh.pop %v862
    %865 = vrot.lane.b32.xlu0 %v863, 64
    %v866 = vpop.permute.xlu0 %865
    %v868 = vmul.f32 %v850, %v866
    %870 = vrot.lane.b32.xlu0 %v755, 64
    %v871 = vpop.permute.xlu0 %870
    %v873 = vsel %vm239, %v771, %v871
    %v875 = vsel %vm96, %v873, 0
    %877 = vmatprep.subr.mxu0 0.0
    %878 = vmatpush1.msra.mxu0 %v230
    %879 = vmatprep.subr.mxu0 0.0
    %880 = vmatpush1.msra.mxu0 %v231
    %881 = vmatprep.subr.mxu0 0.0
    %882 = vmatpush1.msra.mxu0 %v232
    %883 = vmatprep.subr.mxu0 0.0
    %884 = vmatpush1.msra.mxu0 %v233
    %885 = vmatprep.subr.mxu0 0.0
    %886 = vmatpush1.msra.mxu0 %v234
    %887 = vmatprep.subr.mxu0 0.0
    %888 = vmatpush1.msra.mxu0 %v235
    %889 = vmatprep.subr.mxu0 0.0
    %890 = vmatpush1.msra.mxu0 %v236
    %891 = vmatprep.subr.mxu0 0.0
    %892 = vmatpush1.msra.mxu0 %v237
    %893 = vmatprep.subr.mxu0 0.0
    %894 = vmatpush1.msra.mxu0 0.0
    %895 = vmatprep.subr.mxu0 0.0
    %896 = vmatpush1.msra.mxu0 0.0
    %897 = vmatprep.subr.mxu0 0.0
    %898 = vmatpush1.msra.mxu0 0.0
    %899 = vmatprep.subr.mxu0 0.0
    %900 = vmatpush1.msra.mxu0 0.0
    %901 = vmatprep.subr.mxu0 0.0
    %902 = vmatpush1.msra.mxu0 0.0
    %903 = vmatprep.subr.mxu0 0.0
    %904 = vmatpush1.msra.mxu0 0.0
    %905 = vmatprep.subr.mxu0 0.0
    %906 = vmatpush1.msra.mxu0 0.0
    %907 = vmatprep.subr.mxu0 0.0
    %908 = vmatpush1.msra.mxu0 0.0
    %909 = vmatprep.subr.mxu0 0.0
    %910 = vmatpush1.msra.mxu0 0.0
    %911 = vmatprep.subr.mxu0 0.0
    %912 = vmatpush1.msra.mxu0 0.0
    %913 = vmatprep.subr.mxu0 0.0
    %914 = vmatpush1.msra.mxu0 0.0
    %915 = vmatprep.subr.mxu0 0.0
    %916 = vmatpush1.msra.mxu0 0.0
    %917 = vmatprep.subr.mxu0 0.0
    %918 = vmatpush1.msra.mxu0 0.0
    %919 = vmatprep.subr.mxu0 0.0
    %920 = vmatpush1.msra.mxu0 0.0
    %921 = vmatprep.subr.mxu0 0.0
    %922 = vmatpush1.msra.mxu0 0.0
    %923 = vmatprep.subr.mxu0 0.0
    %924 = vmatpush1.msra.mxu0 0.0
    %925 = vmatprep.subr.mxu0 0.0
    %926 = vmatpush1.msra.mxu0 0.0
    %927 = vmatprep.subr.mxu0 0.0
    %928 = vmatpush1.msra.mxu0 0.0
    %929 = vmatprep.subr.mxu0 0.0
    %930 = vmatpush1.msra.mxu0 0.0
    %931 = vmatprep.subr.mxu0 0.0
    %932 = vmatpush1.msra.mxu0 0.0
    %933 = vmatprep.subr.mxu0 0.0
    %934 = vmatpush1.msra.mxu0 0.0
    %935 = vmatprep.subr.mxu0 0.0
    %936 = vmatpush1.msra.mxu0 0.0
    %937 = vmatprep.subr.mxu0 0.0
    %938 = vmatpush1.msra.mxu0 0.0
    %939 = vmatprep.subr.mxu0 0.0
    %940 = vmatpush1.msra.mxu0 0.0
    %941 = vmatprep.mubr.f32.mxu0 0.0
    %942 = vmatmul.mubr.f32.gmra.mrb[0].mxu0 %v875
    %v943 = vpop.f32.mrb[0].mxu0
    %v944 = vadd.f32 %v443, %v943
    %v945 = vpop.f32.mrb[0].mxu0
    %946 = vdwg.mxu0
    %v947 = vxor.u32 %v944, 2147483648
    %v948 = vmul.f32 %v947, 1.442695
    %v949 = vpow.pop %v948
    %v950 = vadd.f32 %v949, 1.0
    %v951 = vrcp.pop %v950
    %v952 = vmul.f32 1.0, %v951
    %v953 = vtanh.pop %v944
    %v954 = vmul.f32 %v952, %v749
    %956 = vrot.lane.b32.xlu0 %v953, 64
    %v957 = vpop.permute.xlu0 %956
    %v959 = vmul.f32 %v952, %v957
    %961 = vrot.lane.b32.xlu0 %v959, 32
    %v962 = vpop.permute.xlu0 %961
    %v964 = vadd.f32 %v954, %v962
    %v965 = vtanh.pop %v964
    %967 = vrot.lane.b32.xlu0 %v965, 64
    %v968 = vpop.permute.xlu0 %967
    %v970 = vmul.f32 %v952, %v968
    %v973 = vunpack.c.l.s4 1983009808
    %v974 = vunpack.c.0.s8 %v973
    %v975 = vlaneseq
    %v976 = vshrl.u32 %v975, 7
    %v977 = vsub.s32 %v974, %v976
    %v978 = vrot.slane %v970, %v977
    %979 = vrot.lane.b32.xlu0 %v978, 96
    %v980 = vpop.permute.xlu0 %979
    %vm982 = vcmask 779776
    %983 = vst.msk [vmem:[%s2] sm:$0x3] %vm982, %v980
    %985 = vrot.lane.b32.xlu0 %v868, 32
    %v986 = vpop.permute.xlu0 %985
    %v987 = vsel %vm239, %v986, 0
    %989 = vmatprep.subr.mxu0 0.0
    %990 = vmatpush1.msra.mxu0 %v226
    %991 = vmatprep.subr.mxu0 0.0
    %992 = vmatpush1.msra.mxu0 %v227
    %993 = vmatprep.subr.mxu0 0.0
    %994 = vmatpush1.msra.mxu0 %v228
    %995 = vmatprep.subr.mxu0 0.0
    %996 = vmatpush1.msra.mxu0 %v229
    %997 = vmatprep.subr.mxu0 0.0
    %998 = vmatpush1.msra.mxu0 0.0
    %999 = vmatprep.subr.mxu0 0.0
    %1000 = vmatpush1.msra.mxu0 0.0
    %1001 = vmatprep.subr.mxu0 0.0
    %1002 = vmatpush1.msra.mxu0 0.0
    %1003 = vmatprep.subr.mxu0 0.0
    %1004 = vmatpush1.msra.mxu0 0.0
    %1005 = vmatprep.subr.mxu0 0.0
    %1006 = vmatpush1.msra.mxu0 0.0
    %1007 = vmatprep.subr.mxu0 0.0
    %1008 = vmatpush1.msra.mxu0 0.0
    %1009 = vmatprep.subr.mxu0 0.0
    %1010 = vmatpush1.msra.mxu0 0.0
    %1011 = vmatprep.subr.mxu0 0.0
    %1012 = vmatpush1.msra.mxu0 0.0
    %1013 = vmatprep.subr.mxu0 0.0
    %1014 = vmatpush1.msra.mxu0 0.0
    %1015 = vmatprep.subr.mxu0 0.0
    %1016 = vmatpush1.msra.mxu0 0.0
    %1017 = vmatprep.subr.mxu0 0.0
    %1018 = vmatpush1.msra.mxu0 0.0
    %1019 = vmatprep.subr.mxu0 0.0
    %1020 = vmatpush1.msra.mxu0 0.0
    %1021 = vmatprep.subr.mxu0 0.0
    %1022 = vmatpush1.msra.mxu0 0.0
    %1023 = vmatprep.subr.mxu0 0.0
    %1024 = vmatpush1.msra.mxu0 0.0
    %1025 = vmatprep.subr.mxu0 0.0
    %1026 = vmatpush1.msra.mxu0 0.0
    %1027 = vmatprep.subr.mxu0 0.0
    %1028 = vmatpush1.msra.mxu0 0.0
    %1029 = vmatprep.subr.mxu0 0.0
    %1030 = vmatpush1.msra.mxu0 0.0
    %1031 = vmatprep.subr.mxu0 0.0
    %1032 = vmatpush1.msra.mxu0 0.0
    %1033 = vmatprep.subr.mxu0 0.0
    %1034 = vmatpush1.msra.mxu0 0.0
    %1035 = vmatprep.subr.mxu0 0.0
    %1036 = vmatpush1.msra.mxu0 0.0
    %1037 = vmatprep.subr.mxu0 0.0
    %1038 = vmatpush1.msra.mxu0 0.0
    %1039 = vmatprep.subr.mxu0 0.0
    %1040 = vmatpush1.msra.mxu0 0.0
    %1041 = vmatprep.subr.mxu0 0.0
    %1042 = vmatpush1.msra.mxu0 0.0
    %1043 = vmatprep.subr.mxu0 0.0
    %1044 = vmatpush1.msra.mxu0 0.0
    %1045 = vmatprep.subr.mxu0 0.0
    %1046 = vmatpush1.msra.mxu0 0.0
    %1047 = vmatprep.subr.mxu0 0.0
    %1048 = vmatpush1.msra.mxu0 0.0
    %1049 = vmatprep.subr.mxu0 0.0
    %1050 = vmatpush1.msra.mxu0 0.0
    %1051 = vmatprep.subr.mxu0 0.0
    %1052 = vmatpush1.msra.mxu0 0.0
    %1053 = vmatprep.mubr.f32.mxu0 0.0
    %1054 = vmatmul.mubr.f32.gmra.mrb[0].mxu0 %v987
    %v1055 = vpop.f32.mrb[0].mxu0
    %v1056 = vadd.f32 0.0, %v1055
    %v1057 = vpop.f32.mrb[0].mxu0
    %1058 = vdwg.mxu0
    %v1059 = vadd.f32 %v208, %v1056
    %v1060 = vxor.u32 %v1059, 2147483648
    %v1061 = vmul.f32 %v1060, 1.442695
    %v1062 = vpow.pop %v1061
    %v1063 = vadd.f32 %v1062, 1.0
    %v1064 = vrcp.pop %v1063
    %v1065 = vmul.f32 1.0, %v1064
    %v1066 = vtanh.pop %v1059
    %v1067 = vmul.f32 %v1065, %v862
    %1069 = vrot.lane.b32.xlu0 %v1066, 64
    %v1070 = vpop.permute.xlu0 %1069
    %v1072 = vmul.f32 %v1065, %v1070
    %1074 = vrot.lane.b32.xlu0 %v1072, 32
    %v1075 = vpop.permute.xlu0 %1074
    %v1077 = vadd.f32 %v1067, %v1075
    %v1078 = vtanh.pop %v1077
    %1080 = vrot.lane.b32.xlu0 %v1078, 64
    %v1081 = vpop.permute.xlu0 %1080
    %v1083 = vmul.f32 %v1065, %v1081
    %1085 = vrot.lane.b32.xlu0 %v970, 64
    %v1086 = vpop.permute.xlu0 %1085
    %v1088 = vsel %vm239, %v986, %v1086
    %v1090 = vsel %vm96, %v1088, 0
    %1092 = vmatprep.subr.mxu0 0.0
    %1093 = vmatpush1.msra.mxu0 %v230
    %1094 = vmatprep.subr.mxu0 0.0
    %1095 = vmatpush1.msra.mxu0 %v231
    %1096 = vmatprep.subr.mxu0 0.0
    %1097 = vmatpush1.msra.mxu0 %v232
    %1098 = vmatprep.subr.mxu0 0.0
    %1099 = vmatpush1.msra.mxu0 %v233
    %1100 = vmatprep.subr.mxu0 0.0
    %1101 = vmatpush1.msra.mxu0 %v234
    %1102 = vmatprep.subr.mxu0 0.0
    %1103 = vmatpush1.msra.mxu0 %v235
    %1104 = vmatprep.subr.mxu0 0.0
    %1105 = vmatpush1.msra.mxu0 %v236
    %1106 = vmatprep.subr.mxu0 0.0
    %1107 = vmatpush1.msra.mxu0 %v237
    %1108 = vmatprep.subr.mxu0 0.0
    %1109 = vmatpush1.msra.mxu0 0.0
    %1110 = vmatprep.subr.mxu0 0.0
    %1111 = vmatpush1.msra.mxu0 0.0
    %1112 = vmatprep.subr.mxu0 0.0
    %1113 = vmatpush1.msra.mxu0 0.0
    %1114 = vmatprep.subr.mxu0 0.0
    %1115 = vmatpush1.msra.mxu0 0.0
    %1116 = vmatprep.subr.mxu0 0.0
    %1117 = vmatpush1.msra.mxu0 0.0
    %1118 = vmatprep.subr.mxu0 0.0
    %1119 = vmatpush1.msra.mxu0 0.0
    %1120 = vmatprep.subr.mxu0 0.0
    %1121 = vmatpush1.msra.mxu0 0.0
    %1122 = vmatprep.subr.mxu0 0.0
    %1123 = vmatpush1.msra.mxu0 0.0
    %1124 = vmatprep.subr.mxu0 0.0
    %1125 = vmatpush1.msra.mxu0 0.0
    %1126 = vmatprep.subr.mxu0 0.0
    %1127 = vmatpush1.msra.mxu0 0.0
    %1128 = vmatprep.subr.mxu0 0.0
    %1129 = vmatpush1.msra.mxu0 0.0
    %1130 = vmatprep.subr.mxu0 0.0
    %1131 = vmatpush1.msra.mxu0 0.0
    %1132 = vmatprep.subr.mxu0 0.0
    %1133 = vmatpush1.msra.mxu0 0.0
    %1134 = vmatprep.subr.mxu0 0.0
    %1135 = vmatpush1.msra.mxu0 0.0
    %1136 = vmatprep.subr.mxu0 0.0
    %1137 = vmatpush1.msra.mxu0 0.0
    %1138 = vmatprep.subr.mxu0 0.0
    %1139 = vmatpush1.msra.mxu0 0.0
    %1140 = vmatprep.subr.mxu0 0.0
    %1141 = vmatpush1.msra.mxu0 0.0
    %1142 = vmatprep.subr.mxu0 0.0
    %1143 = vmatpush1.msra.mxu0 0.0
    %1144 = vmatprep.subr.mxu0 0.0
    %1145 = vmatpush1.msra.mxu0 0.0
    %1146 = vmatprep.subr.mxu0 0.0
    %1147 = vmatpush1.msra.mxu0 0.0
    %1148 = vmatprep.subr.mxu0 0.0
    %1149 = vmatpush1.msra.mxu0 0.0
    %1150 = vmatprep.subr.mxu0 0.0
    %1151 = vmatpush1.msra.mxu0 0.0
    %1152 = vmatprep.subr.mxu0 0.0
    %1153 = vmatpush1.msra.mxu0 0.0
    %1154 = vmatprep.subr.mxu0 0.0
    %1155 = vmatpush1.msra.mxu0 0.0
    %1156 = vmatprep.mubr.f32.mxu0 0.0
    %1157 = vmatmul.mubr.f32.gmra.mrb[0].mxu0 %v1090
    %v1158 = vpop.f32.mrb[0].mxu0
    %v1159 = vadd.f32 %v443, %v1158
    %v1160 = vpop.f32.mrb[0].mxu0
    %1161 = vdwg.mxu0
    %v1162 = vxor.u32 %v1159, 2147483648
    %v1163 = vmul.f32 %v1162, 1.442695
    %v1164 = vpow.pop %v1163
    %v1165 = vadd.f32 %v1164, 1.0
    %v1166 = vrcp.pop %v1165
    %v1167 = vmul.f32 1.0, %v1166
    %v1168 = vtanh.pop %v1159
    %v1169 = vmul.f32 %v1167, %v964
    %1171 = vrot.lane.b32.xlu0 %v1168, 64
    %v1172 = vpop.permute.xlu0 %1171
    %v1174 = vmul.f32 %v1167, %v1172
    %1176 = vrot.lane.b32.xlu0 %v1174, 32
    %v1177 = vpop.permute.xlu0 %1176
    %v1179 = vadd.f32 %v1169, %v1177
    %v1180 = vtanh.pop %v1179
    %1182 = vrot.lane.b32.xlu0 %v1180, 64
    %v1183 = vpop.permute.xlu0 %1182
    %v1185 = vmul.f32 %v1167, %v1183
    %vm1186 = vcmask 1042176
    %1187 = vst.msk [vmem:[%s2] sm:$0x3] %vm1186, %v1185
    %1189 = vrot.lane.b32.xlu0 %v1083, 32
    %v1190 = vpop.permute.xlu0 %1189
    %v1191 = vsel %vm239, %v1190, 0
    %1193 = vmatprep.subr.mxu0 0.0
    %1194 = vmatpush1.msra.mxu0 %v226
    %1195 = vmatprep.subr.mxu0 0.0
    %1196 = vmatpush1.msra.mxu0 %v227
    %1197 = vmatprep.subr.mxu0 0.0
    %1198 = vmatpush1.msra.mxu0 %v228
    %1199 = vmatprep.subr.mxu0 0.0
    %1200 = vmatpush1.msra.mxu0 %v229
    %1201 = vmatprep.subr.mxu0 0.0
    %1202 = vmatpush1.msra.mxu0 0.0
    %1203 = vmatprep.subr.mxu0 0.0
    %1204 = vmatpush1.msra.mxu0 0.0
    %1205 = vmatprep.subr.mxu0 0.0
    %1206 = vmatpush1.msra.mxu0 0.0
    %1207 = vmatprep.subr.mxu0 0.0
    %1208 = vmatpush1.msra.mxu0 0.0
    %1209 = vmatprep.subr.mxu0 0.0
    %1210 = vmatpush1.msra.mxu0 0.0
    %1211 = vmatprep.subr.mxu0 0.0
    %1212 = vmatpush1.msra.mxu0 0.0
    %1213 = vmatprep.subr.mxu0 0.0
    %1214 = vmatpush1.msra.mxu0 0.0
    %1215 = vmatprep.subr.mxu0 0.0
    %1216 = vmatpush1.msra.mxu0 0.0
    %1217 = vmatprep.subr.mxu0 0.0
    %1218 = vmatpush1.msra.mxu0 0.0
    %1219 = vmatprep.subr.mxu0 0.0
    %1220 = vmatpush1.msra.mxu0 0.0
    %1221 = vmatprep.subr.mxu0 0.0
    %1222 = vmatpush1.msra.mxu0 0.0
    %1223 = vmatprep.subr.mxu0 0.0
    %1224 = vmatpush1.msra.mxu0 0.0
    %1225 = vmatprep.subr.mxu0 0.0
    %1226 = vmatpush1.msra.mxu0 0.0
    %1227 = vmatprep.subr.mxu0 0.0
    %1228 = vmatpush1.msra.mxu0 0.0
    %1229 = vmatprep.subr.mxu0 0.0
    %1230 = vmatpush1.msra.mxu0 0.0
    %1231 = vmatprep.subr.mxu0 0.0
    %1232 = vmatpush1.msra.mxu0 0.0
    %1233 = vmatprep.subr.mxu0 0.0
    %1234 = vmatpush1.msra.mxu0 0.0
    %1235 = vmatprep.subr.mxu0 0.0
    %1236 = vmatpush1.msra.mxu0 0.0
    %1237 = vmatprep.subr.mxu0 0.0
    %1238 = vmatpush1.msra.mxu0 0.0
    %1239 = vmatprep.subr.mxu0 0.0
    %1240 = vmatpush1.msra.mxu0 0.0
    %1241 = vmatprep.subr.mxu0 0.0
    %1242 = vmatpush1.msra.mxu0 0.0
    %1243 = vmatprep.subr.mxu0 0.0
    %1244 = vmatpush1.msra.mxu0 0.0
    %1245 = vmatprep.subr.mxu0 0.0
    %1246 = vmatpush1.msra.mxu0 0.0
    %1247 = vmatprep.subr.mxu0 0.0
    %1248 = vmatpush1.msra.mxu0 0.0
    %1249 = vmatprep.subr.mxu0 0.0
    %1250 = vmatpush1.msra.mxu0 0.0
    %1251 = vmatprep.subr.mxu0 0.0
    %1252 = vmatpush1.msra.mxu0 0.0
    %1253 = vmatprep.subr.mxu0 0.0
    %1254 = vmatpush1.msra.mxu0 0.0
    %1255 = vmatprep.subr.mxu0 0.0
    %1256 = vmatpush1.msra.mxu0 0.0
    %1257 = vmatprep.mubr.f32.mxu0 0.0
    %1258 = vmatmul.mubr.f32.gmra.mrb[0].mxu0 %v1191
    %v1259 = vpop.f32.mrb[0].mxu0
    %v1260 = vadd.f32 0.0, %v1259
    %v1261 = vpop.f32.mrb[0].mxu0
    %1262 = vdwg.mxu0
    %v1263 = vadd.f32 %v213, %v1260
    %v1264 = vxor.u32 %v1263, 2147483648
    %v1265 = vmul.f32 %v1264, 1.442695
    %v1266 = vpow.pop %v1265
    %v1267 = vadd.f32 %v1266, 1.0
    %v1268 = vrcp.pop %v1267
    %v1269 = vmul.f32 1.0, %v1268
    %v1270 = vtanh.pop %v1263
    %v1271 = vmul.f32 %v1269, %v1077
    %1273 = vrot.lane.b32.xlu0 %v1270, 64
    %v1274 = vpop.permute.xlu0 %1273
    %v1276 = vmul.f32 %v1269, %v1274
    %1278 = vrot.lane.b32.xlu0 %v1276, 32
    %v1279 = vpop.permute.xlu0 %1278
    %v1281 = vadd.f32 %v1271, %v1279
    %v1282 = vtanh.pop %v1281
    %1284 = vrot.lane.b32.xlu0 %v1282, 64
    %v1285 = vpop.permute.xlu0 %1284
    %v1287 = vmul.f32 %v1269, %v1285
    %1290 = vrot.lane.b32.xlu0 %v1185, 64
    %v1291 = vpop.permute.xlu0 %1290
    %v1293 = vsel %vm239, %v1190, %v1291
    %v1295 = vsel %vm96, %v1293, 0
    %1297 = vmatprep.subr.mxu0 0.0
    %1298 = vmatpush1.msra.mxu0 %v230
    %1299 = vmatprep.subr.mxu0 0.0
    %1300 = vmatpush1.msra.mxu0 %v231
    %1301 = vmatprep.subr.mxu0 0.0
    %1302 = vmatpush1.msra.mxu0 %v232
    %1303 = vmatprep.subr.mxu0 0.0
    %1304 = vmatpush1.msra.mxu0 %v233
    %1305 = vmatprep.subr.mxu0 0.0
    %1306 = vmatpush1.msra.mxu0 %v234
    %1307 = vmatprep.subr.mxu0 0.0
    %1308 = vmatpush1.msra.mxu0 %v235
    %1309 = vmatprep.subr.mxu0 0.0
    %1310 = vmatpush1.msra.mxu0 %v236
    %1311 = vmatprep.subr.mxu0 0.0
    %1312 = vmatpush1.msra.mxu0 %v237
    %1313 = vmatprep.subr.mxu0 0.0
    %1314 = vmatpush1.msra.mxu0 0.0
    %1315 = vmatprep.subr.mxu0 0.0
    %1316 = vmatpush1.msra.mxu0 0.0
    %1317 = vmatprep.subr.mxu0 0.0
    %1318 = vmatpush1.msra.mxu0 0.0
    %1319 = vmatprep.subr.mxu0 0.0
    %1320 = vmatpush1.msra.mxu0 0.0
    %1321 = vmatprep.subr.mxu0 0.0
    %1322 = vmatpush1.msra.mxu0 0.0
    %1323 = vmatprep.subr.mxu0 0.0
    %1324 = vmatpush1.msra.mxu0 0.0
    %1325 = vmatprep.subr.mxu0 0.0
    %1326 = vmatpush1.msra.mxu0 0.0
    %1327 = vmatprep.subr.mxu0 0.0
    %1328 = vmatpush1.msra.mxu0 0.0
    %1329 = vmatprep.subr.mxu0 0.0
    %1330 = vmatpush1.msra.mxu0 0.0
    %1331 = vmatprep.subr.mxu0 0.0
    %1332 = vmatpush1.msra.mxu0 0.0
    %1333 = vmatprep.subr.mxu0 0.0
    %1334 = vmatpush1.msra.mxu0 0.0
    %1335 = vmatprep.subr.mxu0 0.0
    %1336 = vmatpush1.msra.mxu0 0.0
    %1337 = vmatprep.subr.mxu0 0.0
    %1338 = vmatpush1.msra.mxu0 0.0
    %1339 = vmatprep.subr.mxu0 0.0
    %1340 = vmatpush1.msra.mxu0 0.0
    %1341 = vmatprep.subr.mxu0 0.0
    %1342 = vmatpush1.msra.mxu0 0.0
    %1343 = vmatprep.subr.mxu0 0.0
    %1344 = vmatpush1.msra.mxu0 0.0
    %1345 = vmatprep.subr.mxu0 0.0
    %1346 = vmatpush1.msra.mxu0 0.0
    %1347 = vmatprep.subr.mxu0 0.0
    %1348 = vmatpush1.msra.mxu0 0.0
    %1349 = vmatprep.subr.mxu0 0.0
    %1350 = vmatpush1.msra.mxu0 0.0
    %1351 = vmatprep.subr.mxu0 0.0
    %1352 = vmatpush1.msra.mxu0 0.0
    %1353 = vmatprep.subr.mxu0 0.0
    %1354 = vmatpush1.msra.mxu0 0.0
    %1355 = vmatprep.subr.mxu0 0.0
    %1356 = vmatpush1.msra.mxu0 0.0
    %1357 = vmatprep.subr.mxu0 0.0
    %1358 = vmatpush1.msra.mxu0 0.0
    %1359 = vmatprep.subr.mxu0 0.0
    %1360 = vmatpush1.msra.mxu0 0.0
    %1361 = vmatprep.mubr.f32.mxu0 0.0
    %1362 = vmatmul.mubr.f32.gmra.mrb[0].mxu0 %v1295
    %v1363 = vpop.f32.mrb[0].mxu0
    %v1364 = vadd.f32 %v443, %v1363
    %v1365 = vpop.f32.mrb[0].mxu0
    %1366 = vdwg.mxu0
    %v1367 = vxor.u32 %v1364, 2147483648
    %v1368 = vmul.f32 %v1367, 1.442695
    %v1369 = vpow.pop %v1368
    %v1370 = vadd.f32 %v1369, 1.0
    %v1371 = vrcp.pop %v1370
    %v1372 = vmul.f32 1.0, %v1371
    %v1373 = vtanh.pop %v1364
    %v1374 = vmul.f32 %v1372, %v1179
    %1376 = vrot.lane.b32.xlu0 %v1373, 64
    %v1377 = vpop.permute.xlu0 %1376
    %v1379 = vmul.f32 %v1372, %v1377
    %1381 = vrot.lane.b32.xlu0 %v1379, 32
    %v1382 = vpop.permute.xlu0 %1381
    %v1384 = vadd.f32 %v1374, %v1382
    %v1385 = vtanh.pop %v1384
    %1387 = vrot.lane.b32.xlu0 %v1385, 64
    %v1388 = vpop.permute.xlu0 %1387
    %v1390 = vmul.f32 %v1372, %v1388
    %v1393 = vunpack.c.l.s4 1983009808
    %v1394 = vunpack.c.0.s8 %v1393
    %v1395 = vlaneseq
    %v1396 = vshrl.u32 %v1395, 7
    %v1397 = vsub.s32 %v1394, %v1396
    %v1398 = vrot.slane %v1390, %v1397
    %1399 = vrot.lane.b32.xlu0 %v1398, 32
    %v1400 = vpop.permute.xlu0 %1399
    %1402 = vst.msk [vmem:[%s2 + $0x2] sm:$0x3] %vm552, %v1400
    %1404 = vrot.lane.b32.xlu0 %v1287, 32
    %v1405 = vpop.permute.xlu0 %1404
    %v1406 = vsel %vm239, %v1405, 0
    %1408 = vmatprep.subr.mxu0 0.0
    %1409 = vmatpush1.msra.mxu0 %v226
    %1410 = vmatprep.subr.mxu0 0.0
    %1411 = vmatpush1.msra.mxu0 %v227
    %1412 = vmatprep.subr.mxu0 0.0
    %1413 = vmatpush1.msra.mxu0 %v228
    %1414 = vmatprep.subr.mxu0 0.0
    %1415 = vmatpush1.msra.mxu0 %v229
    %1416 = vmatprep.subr.mxu0 0.0
    %1417 = vmatpush1.msra.mxu0 0.0
    %1418 = vmatprep.subr.mxu0 0.0
    %1419 = vmatpush1.msra.mxu0 0.0
    %1420 = vmatprep.subr.mxu0 0.0
    %1421 = vmatpush1.msra.mxu0 0.0
    %1422 = vmatprep.subr.mxu0 0.0
    %1423 = vmatpush1.msra.mxu0 0.0
    %1424 = vmatprep.subr.mxu0 0.0
    %1425 = vmatpush1.msra.mxu0 0.0
    %1426 = vmatprep.subr.mxu0 0.0
    %1427 = vmatpush1.msra.mxu0 0.0
    %1428 = vmatprep.subr.mxu0 0.0
    %1429 = vmatpush1.msra.mxu0 0.0
    %1430 = vmatprep.subr.mxu0 0.0
    %1431 = vmatpush1.msra.mxu0 0.0
    %1432 = vmatprep.subr.mxu0 0.0
    %1433 = vmatpush1.msra.mxu0 0.0
    %1434 = vmatprep.subr.mxu0 0.0
    %1435 = vmatpush1.msra.mxu0 0.0
    %1436 = vmatprep.subr.mxu0 0.0
    %1437 = vmatpush1.msra.mxu0 0.0
    %1438 = vmatprep.subr.mxu0 0.0
    %1439 = vmatpush1.msra.mxu0 0.0
    %1440 = vmatprep.subr.mxu0 0.0
    %1441 = vmatpush1.msra.mxu0 0.0
    %1442 = vmatprep.subr.mxu0 0.0
    %1443 = vmatpush1.msra.mxu0 0.0
    %1444 = vmatprep.subr.mxu0 0.0
    %1445 = vmatpush1.msra.mxu0 0.0
    %1446 = vmatprep.subr.mxu0 0.0
    %1447 = vmatpush1.msra.mxu0 0.0
    %1448 = vmatprep.subr.mxu0 0.0
    %1449 = vmatpush1.msra.mxu0 0.0
    %1450 = vmatprep.subr.mxu0 0.0
    %1451 = vmatpush1.msra.mxu0 0.0
    %1452 = vmatprep.subr.mxu0 0.0
    %1453 = vmatpush1.msra.mxu0 0.0
    %1454 = vmatprep.subr.mxu0 0.0
    %1455 = vmatpush1.msra.mxu0 0.0
    %1456 = vmatprep.subr.mxu0 0.0
    %1457 = vmatpush1.msra.mxu0 0.0
    %1458 = vmatprep.subr.mxu0 0.0
    %1459 = vmatpush1.msra.mxu0 0.0
    %1460 = vmatprep.subr.mxu0 0.0
    %1461 = vmatpush1.msra.mxu0 0.0
    %1462 = vmatprep.subr.mxu0 0.0
    %1463 = vmatpush1.msra.mxu0 0.0
    %1464 = vmatprep.subr.mxu0 0.0
    %1465 = vmatpush1.msra.mxu0 0.0
    %1466 = vmatprep.subr.mxu0 0.0
    %1467 = vmatpush1.msra.mxu0 0.0
    %1468 = vmatprep.subr.mxu0 0.0
    %1469 = vmatpush1.msra.mxu0 0.0
    %1470 = vmatprep.subr.mxu0 0.0
    %1471 = vmatpush1.msra.mxu0 0.0
    %1472 = vmatprep.mubr.f32.mxu0 0.0
    %1473 = vmatmul.mubr.f32.gmra.mrb[0].mxu0 %v1406
    %v1474 = vpop.f32.mrb[0].mxu0
    %v1475 = vadd.f32 0.0, %v1474
    %v1476 = vpop.f32.mrb[0].mxu0
    %1477 = vdwg.mxu0
    %v1478 = vadd.f32 %v218, %v1475
    %v1479 = vxor.u32 %v1478, 2147483648
    %v1480 = vmul.f32 %v1479, 1.442695
    %v1481 = vpow.pop %v1480
    %v1482 = vadd.f32 %v1481, 1.0
    %v1483 = vrcp.pop %v1482
    %v1484 = vmul.f32 1.0, %v1483
    %v1485 = vtanh.pop %v1478
    %v1486 = vmul.f32 %v1484, %v1281
    %1488 = vrot.lane.b32.xlu0 %v1485, 64
    %v1489 = vpop.permute.xlu0 %1488
    %v1491 = vmul.f32 %v1484, %v1489
    %1493 = vrot.lane.b32.xlu0 %v1491, 32
    %v1494 = vpop.permute.xlu0 %1493
    %v1496 = vadd.f32 %v1486, %v1494
    %v1497 = vtanh.pop %v1496
    %1499 = vrot.lane.b32.xlu0 %v1497, 64
    %v1500 = vpop.permute.xlu0 %1499
    %v1502 = vmul.f32 %v1484, %v1500
    %1504 = vrot.lane.b32.xlu0 %v1390, 64
    %v1505 = vpop.permute.xlu0 %1504
    %v1507 = vsel %vm239, %v1405, %v1505
    %v1509 = vsel %vm96, %v1507, 0
    %1511 = vmatprep.subr.mxu0 0.0
    %1512 = vmatpush1.msra.mxu0 %v230
    %1513 = vmatprep.subr.mxu0 0.0
    %1514 = vmatpush1.msra.mxu0 %v231
    %1515 = vmatprep.subr.mxu0 0.0
    %1516 = vmatpush1.msra.mxu0 %v232
    %1517 = vmatprep.subr.mxu0 0.0
    %1518 = vmatpush1.msra.mxu0 %v233
    %1519 = vmatprep.subr.mxu0 0.0
    %1520 = vmatpush1.msra.mxu0 %v234
    %1521 = vmatprep.subr.mxu0 0.0
    %1522 = vmatpush1.msra.mxu0 %v235
    %1523 = vmatprep.subr.mxu0 0.0
    %1524 = vmatpush1.msra.mxu0 %v236
    %1525 = vmatprep.subr.mxu0 0.0
    %1526 = vmatpush1.msra.mxu0 %v237
    %1527 = vmatprep.subr.mxu0 0.0
    %1528 = vmatpush1.msra.mxu0 0.0
    %1529 = vmatprep.subr.mxu0 0.0
    %1530 = vmatpush1.msra.mxu0 0.0
    %1531 = vmatprep.subr.mxu0 0.0
    %1532 = vmatpush1.msra.mxu0 0.0
    %1533 = vmatprep.subr.mxu0 0.0
    %1534 = vmatpush1.msra.mxu0 0.0
    %1535 = vmatprep.subr.mxu0 0.0
    %1536 = vmatpush1.msra.mxu0 0.0
    %1537 = vmatprep.subr.mxu0 0.0
    %1538 = vmatpush1.msra.mxu0 0.0
    %1539 = vmatprep.subr.mxu0 0.0
    %1540 = vmatpush1.msra.mxu0 0.0
    %1541 = vmatprep.subr.mxu0 0.0
    %1542 = vmatpush1.msra.mxu0 0.0
    %1543 = vmatprep.subr.mxu0 0.0
    %1544 = vmatpush1.msra.mxu0 0.0
    %1545 = vmatprep.subr.mxu0 0.0
    %1546 = vmatpush1.msra.mxu0 0.0
    %1547 = vmatprep.subr.mxu0 0.0
    %1548 = vmatpush1.msra.mxu0 0.0
    %1549 = vmatprep.subr.mxu0 0.0
    %1550 = vmatpush1.msra.mxu0 0.0
    %1551 = vmatprep.subr.mxu0 0.0
    %1552 = vmatpush1.msra.mxu0 0.0
    %1553 = vmatprep.subr.mxu0 0.0
    %1554 = vmatpush1.msra.mxu0 0.0
    %1555 = vmatprep.subr.mxu0 0.0
    %1556 = vmatpush1.msra.mxu0 0.0
    %1557 = vmatprep.subr.mxu0 0.0
    %1558 = vmatpush1.msra.mxu0 0.0
    %1559 = vmatprep.subr.mxu0 0.0
    %1560 = vmatpush1.msra.mxu0 0.0
    %1561 = vmatprep.subr.mxu0 0.0
    %1562 = vmatpush1.msra.mxu0 0.0
    %1563 = vmatprep.subr.mxu0 0.0
    %1564 = vmatpush1.msra.mxu0 0.0
    %1565 = vmatprep.subr.mxu0 0.0
    %1566 = vmatpush1.msra.mxu0 0.0
    %1567 = vmatprep.subr.mxu0 0.0
    %1568 = vmatpush1.msra.mxu0 0.0
    %1569 = vmatprep.subr.mxu0 0.0
    %1570 = vmatpush1.msra.mxu0 0.0
    %1571 = vmatprep.subr.mxu0 0.0
    %1572 = vmatpush1.msra.mxu0 0.0
    %1573 = vmatprep.subr.mxu0 0.0
    %1574 = vmatpush1.msra.mxu0 0.0
    %1575 = vmatprep.mubr.f32.mxu0 0.0
    %1576 = vmatmul.mubr.f32.gmra.mrb[0].mxu0 %v1509
    %v1577 = vpop.f32.mrb[0].mxu0
    %v1578 = vadd.f32 %v443, %v1577
    %v1579 = vpop.f32.mrb[0].mxu0
    %1580 = vdwg.mxu0
    %v1581 = vxor.u32 %v1578, 2147483648
    %v1582 = vmul.f32 %v1581, 1.442695
    %v1583 = vpow.pop %v1582
    %v1584 = vadd.f32 %v1583, 1.0
    %v1585 = vrcp.pop %v1584
    %v1586 = vmul.f32 1.0, %v1585
    %v1587 = vtanh.pop %v1578
    %v1588 = vmul.f32 %v1586, %v1384
    %1590 = vrot.lane.b32.xlu0 %v1587, 64
    %v1591 = vpop.permute.xlu0 %1590
    %v1593 = vmul.f32 %v1586, %v1591
    %1595 = vrot.lane.b32.xlu0 %v1593, 32
    %v1596 = vpop.permute.xlu0 %1595
    %v1598 = vadd.f32 %v1588, %v1596
    %v1599 = vtanh.pop %v1598
    %1601 = vrot.lane.b32.xlu0 %v1599, 64
    %v1602 = vpop.permute.xlu0 %1601
    %v1604 = vmul.f32 %v1586, %v1602
    %v1607 = vunpack.c.l.s4 1983009808
    %v1608 = vunpack.c.0.s8 %v1607
    %v1609 = vlaneseq
    %v1610 = vshrl.u32 %v1609, 7
    %v1611 = vsub.s32 %v1608, %v1610
    %v1612 = vrot.slane %v1604, %v1611
    %1613 = vrot.lane.b32.xlu0 %v1612, 64
    %v1614 = vpop.permute.xlu0 %1613
    %1616 = vst.msk [vmem:[%s2 + $0x2] sm:$0x3] %vm767, %v1614
    %1618 = vrot.lane.b32.xlu0 %v1502, 32
    %v1619 = vpop.permute.xlu0 %1618
    %v1620 = vsel %vm239, %v1619, 0
    %1622 = vmatprep.subr.mxu0 0.0
    %1623 = vmatpush1.msra.mxu0 %v226
    %1624 = vmatprep.subr.mxu0 0.0
    %1625 = vmatpush1.msra.mxu0 %v227
    %1626 = vmatprep.subr.mxu0 0.0
    %1627 = vmatpush1.msra.mxu0 %v228
    %1628 = vmatprep.subr.mxu0 0.0
    %1629 = vmatpush1.msra.mxu0 %v229
    %1630 = vmatprep.subr.mxu0 0.0
    %1631 = vmatpush1.msra.mxu0 0.0
    %1632 = vmatprep.subr.mxu0 0.0
    %1633 = vmatpush1.msra.mxu0 0.0
    %1634 = vmatprep.subr.mxu0 0.0
    %1635 = vmatpush1.msra.mxu0 0.0
    %1636 = vmatprep.subr.mxu0 0.0
    %1637 = vmatpush1.msra.mxu0 0.0
    %1638 = vmatprep.subr.mxu0 0.0
    %1639 = vmatpush1.msra.mxu0 0.0
    %1640 = vmatprep.subr.mxu0 0.0
    %1641 = vmatpush1.msra.mxu0 0.0
    %1642 = vmatprep.subr.mxu0 0.0
    %1643 = vmatpush1.msra.mxu0 0.0
    %1644 = vmatprep.subr.mxu0 0.0
    %1645 = vmatpush1.msra.mxu0 0.0
    %1646 = vmatprep.subr.mxu0 0.0
    %1647 = vmatpush1.msra.mxu0 0.0
    %1648 = vmatprep.subr.mxu0 0.0
    %1649 = vmatpush1.msra.mxu0 0.0
    %1650 = vmatprep.subr.mxu0 0.0
    %1651 = vmatpush1.msra.mxu0 0.0
    %1652 = vmatprep.subr.mxu0 0.0
    %1653 = vmatpush1.msra.mxu0 0.0
    %1654 = vmatprep.subr.mxu0 0.0
    %1655 = vmatpush1.msra.mxu0 0.0
    %1656 = vmatprep.subr.mxu0 0.0
    %1657 = vmatpush1.msra.mxu0 0.0
    %1658 = vmatprep.subr.mxu0 0.0
    %1659 = vmatpush1.msra.mxu0 0.0
    %1660 = vmatprep.subr.mxu0 0.0
    %1661 = vmatpush1.msra.mxu0 0.0
    %1662 = vmatprep.subr.mxu0 0.0
    %1663 = vmatpush1.msra.mxu0 0.0
    %1664 = vmatprep.subr.mxu0 0.0
    %1665 = vmatpush1.msra.mxu0 0.0
    %1666 = vmatprep.subr.mxu0 0.0
    %1667 = vmatpush1.msra.mxu0 0.0
    %1668 = vmatprep.subr.mxu0 0.0
    %1669 = vmatpush1.msra.mxu0 0.0
    %1670 = vmatprep.subr.mxu0 0.0
    %1671 = vmatpush1.msra.mxu0 0.0
    %1672 = vmatprep.subr.mxu0 0.0
    %1673 = vmatpush1.msra.mxu0 0.0
    %1674 = vmatprep.subr.mxu0 0.0
    %1675 = vmatpush1.msra.mxu0 0.0
    %1676 = vmatprep.subr.mxu0 0.0
    %1677 = vmatpush1.msra.mxu0 0.0
    %1678 = vmatprep.subr.mxu0 0.0
    %1679 = vmatpush1.msra.mxu0 0.0
    %1680 = vmatprep.subr.mxu0 0.0
    %1681 = vmatpush1.msra.mxu0 0.0
    %1682 = vmatprep.subr.mxu0 0.0
    %1683 = vmatpush1.msra.mxu0 0.0
    %1684 = vmatprep.subr.mxu0 0.0
    %1685 = vmatpush1.msra.mxu0 0.0
    %1686 = vmatprep.mubr.f32.mxu0 0.0
    %1687 = vmatmul.mubr.f32.gmra.mrb[0].mxu0 %v1620
    %v1688 = vpop.f32.mrb[0].mxu0
    %v1689 = vadd.f32 0.0, %v1688
    %v1690 = vpop.f32.mrb[0].mxu0
    %1691 = vdwg.mxu0
    %v1692 = vadd.f32 %v223, %v1689
    %v1693 = vxor.u32 %v1692, 2147483648
    %v1694 = vmul.f32 %v1693, 1.442695
    %v1695 = vpow.pop %v1694
    %v1696 = vadd.f32 %v1695, 1.0
    %v1697 = vrcp.pop %v1696
    %v1698 = vmul.f32 1.0, %v1697
    %v1699 = vtanh.pop %v1692
    %v1700 = vmul.f32 %v1698, %v1496
    %1702 = vrot.lane.b32.xlu0 %v1699, 64
    %v1703 = vpop.permute.xlu0 %1702
    %v1705 = vmul.f32 %v1698, %v1703
    %1707 = vrot.lane.b32.xlu0 %v1705, 32
    %v1708 = vpop.permute.xlu0 %1707
    %v1710 = vadd.f32 %v1700, %v1708
    %v1711 = vtanh.pop %v1710
    %1713 = vrot.lane.b32.xlu0 %v1711, 64
    %v1714 = vpop.permute.xlu0 %1713
    %v1716 = vmul.f32 %v1698, %v1714
    %1718 = vrot.lane.b32.xlu0 %v1604, 64
    %v1719 = vpop.permute.xlu0 %1718
    %v1721 = vsel %vm239, %v1619, %v1719
    %v1723 = vsel %vm96, %v1721, 0
    %1725 = vmatprep.subr.mxu0 0.0
    %1726 = vmatpush1.msra.mxu0 %v230
    %1727 = vmatprep.subr.mxu0 0.0
    %1728 = vmatpush1.msra.mxu0 %v231
    %1729 = vmatprep.subr.mxu0 0.0
    %1730 = vmatpush1.msra.mxu0 %v232
    %1731 = vmatprep.subr.mxu0 0.0
    %1732 = vmatpush1.msra.mxu0 %v233
    %1733 = vmatprep.subr.mxu0 0.0
    %1734 = vmatpush1.msra.mxu0 %v234
    %1735 = vmatprep.subr.mxu0 0.0
    %1736 = vmatpush1.msra.mxu0 %v235
    %1737 = vmatprep.subr.mxu0 0.0
    %1738 = vmatpush1.msra.mxu0 %v236
    %1739 = vmatprep.subr.mxu0 0.0
    %1740 = vmatpush1.msra.mxu0 %v237
    %1741 = vmatprep.subr.mxu0 0.0
    %1742 = vmatpush1.msra.mxu0 0.0
    %1743 = vmatprep.subr.mxu0 0.0
    %1744 = vmatpush1.msra.mxu0 0.0
    %1745 = vmatprep.subr.mxu0 0.0
    %1746 = vmatpush1.msra.mxu0 0.0
    %1747 = vmatprep.subr.mxu0 0.0
    %1748 = vmatpush1.msra.mxu0 0.0
    %1749 = vmatprep.subr.mxu0 0.0
    %1750 = vmatpush1.msra.mxu0 0.0
    %1751 = vmatprep.subr.mxu0 0.0
    %1752 = vmatpush1.msra.mxu0 0.0
    %1753 = vmatprep.subr.mxu0 0.0
    %1754 = vmatpush1.msra.mxu0 0.0
    %1755 = vmatprep.subr.mxu0 0.0
    %1756 = vmatpush1.msra.mxu0 0.0
    %1757 = vmatprep.subr.mxu0 0.0
    %1758 = vmatpush1.msra.mxu0 0.0
    %1759 = vmatprep.subr.mxu0 0.0
    %1760 = vmatpush1.msra.mxu0 0.0
    %1761 = vmatprep.subr.mxu0 0.0
    %1762 = vmatpush1.msra.mxu0 0.0
    %1763 = vmatprep.subr.mxu0 0.0
    %1764 = vmatpush1.msra.mxu0 0.0
    %1765 = vmatprep.subr.mxu0 0.0
    %1766 = vmatpush1.msra.mxu0 0.0
    %1767 = vmatprep.subr.mxu0 0.0
    %1768 = vmatpush1.msra.mxu0 0.0
    %1769 = vmatprep.subr.mxu0 0.0
    %1770 = vmatpush1.msra.mxu0 0.0
    %1771 = vmatprep.subr.mxu0 0.0
    %1772 = vmatpush1.msra.mxu0 0.0
    %1773 = vmatprep.subr.mxu0 0.0
    %1774 = vmatpush1.msra.mxu0 0.0
    %1775 = vmatprep.subr.mxu0 0.0
    %1776 = vmatpush1.msra.mxu0 0.0
    %1777 = vmatprep.subr.mxu0 0.0
    %1778 = vmatpush1.msra.mxu0 0.0
    %1779 = vmatprep.subr.mxu0 0.0
    %1780 = vmatpush1.msra.mxu0 0.0
    %1781 = vmatprep.subr.mxu0 0.0
    %1782 = vmatpush1.msra.mxu0 0.0
    %1783 = vmatprep.subr.mxu0 0.0
    %1784 = vmatpush1.msra.mxu0 0.0
    %1785 = vmatprep.subr.mxu0 0.0
    %1786 = vmatpush1.msra.mxu0 0.0
    %1787 = vmatprep.subr.mxu0 0.0
    %1788 = vmatpush1.msra.mxu0 0.0
    %1789 = vmatprep.mubr.f32.mxu0 0.0
    %1790 = vmatmul.mubr.f32.gmra.mrb[0].mxu0 %v1723
    %v1791 = vpop.f32.mrb[0].mxu0
    %v1792 = vadd.f32 %v443, %v1791
    %v1793 = vpop.f32.mrb[0].mxu0
    %1794 = vdwg.mxu0
    %v1795 = vxor.u32 %v1792, 2147483648
    %v1796 = vmul.f32 %v1795, 1.442695
    %v1797 = vpow.pop %v1796
    %v1798 = vadd.f32 %v1797, 1.0
    %v1799 = vrcp.pop %v1798
    %v1800 = vmul.f32 1.0, %v1799
    %v1801 = vtanh.pop %v1792
    %v1802 = vmul.f32 %v1800, %v1598
    %1804 = vrot.lane.b32.xlu0 %v1801, 64
    %v1805 = vpop.permute.xlu0 %1804
    %v1807 = vmul.f32 %v1800, %v1805
    %1809 = vrot.lane.b32.xlu0 %v1807, 32
    %v1810 = vpop.permute.xlu0 %1809
    %v1812 = vadd.f32 %v1802, %v1810
    %v1813 = vtanh.pop %v1812
    %1815 = vrot.lane.b32.xlu0 %v1813, 64
    %v1816 = vpop.permute.xlu0 %1815
    %v1818 = vmul.f32 %v1800, %v1816
    %v1821 = vunpack.c.l.s4 1983009808
    %v1822 = vunpack.c.0.s8 %v1821
    %v1823 = vlaneseq
    %v1824 = vshrl.u32 %v1823, 7
    %v1825 = vsub.s32 %v1822, %v1824
    %v1826 = vrot.slane %v1818, %v1825
    %1827 = vrot.lane.b32.xlu0 %v1826, 96
    %v1828 = vpop.permute.xlu0 %1827
    %1830 = vst.msk [vmem:[%s2 + $0x2] sm:$0x3] %vm982, %v1828
    %1832 = vrot.lane.b32.xlu0 %v1716, 32
    %v1833 = vpop.permute.xlu0 %1832
    %1835 = vrot.lane.b32.xlu0 %v1818, 64
    %v1836 = vpop.permute.xlu0 %1835
    %v1838 = vsel %vm239, %v1833, %v1836
    %v1840 = vsel %vm96, %v1838, 0
    %1842 = vmatprep.subr.mxu0 0.0
    %1843 = vmatpush1.msra.mxu0 %v230
    %1844 = vmatprep.subr.mxu0 0.0
    %1845 = vmatpush1.msra.mxu0 %v231
    %1846 = vmatprep.subr.mxu0 0.0
    %1847 = vmatpush1.msra.mxu0 %v232
    %1848 = vmatprep.subr.mxu0 0.0
    %1849 = vmatpush1.msra.mxu0 %v233
    %1850 = vmatprep.subr.mxu0 0.0
    %1851 = vmatpush1.msra.mxu0 %v234
    %1852 = vmatprep.subr.mxu0 0.0
    %1853 = vmatpush1.msra.mxu0 %v235
    %1854 = vmatprep.subr.mxu0 0.0
    %1855 = vmatpush1.msra.mxu0 %v236
    %1856 = vmatprep.subr.mxu0 0.0
    %1857 = vmatpush1.msra.mxu0 %v237
    %1858 = vmatprep.subr.mxu0 0.0
    %1859 = vmatpush1.msra.mxu0 0.0
    %1860 = vmatprep.subr.mxu0 0.0
    %1861 = vmatpush1.msra.mxu0 0.0
    %1862 = vmatprep.subr.mxu0 0.0
    %1863 = vmatpush1.msra.mxu0 0.0
    %1864 = vmatprep.subr.mxu0 0.0
    %1865 = vmatpush1.msra.mxu0 0.0
    %1866 = vmatprep.subr.mxu0 0.0
    %1867 = vmatpush1.msra.mxu0 0.0
    %1868 = vmatprep.subr.mxu0 0.0
    %1869 = vmatpush1.msra.mxu0 0.0
    %1870 = vmatprep.subr.mxu0 0.0
    %1871 = vmatpush1.msra.mxu0 0.0
    %1872 = vmatprep.subr.mxu0 0.0
    %1873 = vmatpush1.msra.mxu0 0.0
    %1874 = vmatprep.subr.mxu0 0.0
    %1875 = vmatpush1.msra.mxu0 0.0
    %1876 = vmatprep.subr.mxu0 0.0
    %1877 = vmatpush1.msra.mxu0 0.0
    %1878 = vmatprep.subr.mxu0 0.0
    %1879 = vmatpush1.msra.mxu0 0.0
    %1880 = vmatprep.subr.mxu0 0.0
    %1881 = vmatpush1.msra.mxu0 0.0
    %1882 = vmatprep.subr.mxu0 0.0
    %1883 = vmatpush1.msra.mxu0 0.0
    %1884 = vmatprep.subr.mxu0 0.0
    %1885 = vmatpush1.msra.mxu0 0.0
    %1886 = vmatprep.subr.mxu0 0.0
    %1887 = vmatpush1.msra.mxu0 0.0
    %1888 = vmatprep.subr.mxu0 0.0
    %1889 = vmatpush1.msra.mxu0 0.0
    %1890 = vmatprep.subr.mxu0 0.0
    %1891 = vmatpush1.msra.mxu0 0.0
    %1892 = vmatprep.subr.mxu0 0.0
    %1893 = vmatpush1.msra.mxu0 0.0
    %1894 = vmatprep.subr.mxu0 0.0
    %1895 = vmatpush1.msra.mxu0 0.0
    %1896 = vmatprep.subr.mxu0 0.0
    %1897 = vmatpush1.msra.mxu0 0.0
    %1898 = vmatprep.subr.mxu0 0.0
    %1899 = vmatpush1.msra.mxu0 0.0
    %1900 = vmatprep.subr.mxu0 0.0
    %1901 = vmatpush1.msra.mxu0 0.0
    %1902 = vmatprep.subr.mxu0 0.0
    %1903 = vmatpush1.msra.mxu0 0.0
    %1904 = vmatprep.subr.mxu0 0.0
    %1905 = vmatpush1.msra.mxu0 0.0
    %1906 = vmatprep.mubr.f32.mxu0 0.0
    %1907 = vmatmul.mubr.f32.gmra.mrb[0].mxu0 %v1840
    %v1908 = vpop.f32.mrb[0].mxu0
    %v1909 = vadd.f32 %v443, %v1908
    %v1910 = vpop.f32.mrb[0].mxu0
    %1911 = vdwg.mxu0
    %v1912 = vxor.u32 %v1909, 2147483648
    %v1913 = vmul.f32 %v1912, 1.442695
    %v1914 = vpow.pop %v1913
    %v1915 = vadd.f32 %v1914, 1.0
    %v1916 = vrcp.pop %v1915
    %v1917 = vmul.f32 1.0, %v1916
    %v1918 = vtanh.pop %v1909
    %v1919 = vmul.f32 %v1917, %v1812
    %1921 = vrot.lane.b32.xlu0 %v1918, 64
    %v1922 = vpop.permute.xlu0 %1921
    %v1924 = vmul.f32 %v1917, %v1922
    %1926 = vrot.lane.b32.xlu0 %v1924, 32
    %v1927 = vpop.permute.xlu0 %1926
    %v1929 = vadd.f32 %v1919, %v1927
    %v1930 = vtanh.pop %v1929
    %1932 = vrot.lane.b32.xlu0 %v1930, 64
    %v1933 = vpop.permute.xlu0 %1932
    %v1935 = vmul.f32 %v1917, %v1933
    %1936 = vst.msk [vmem:[%s2 + $0x2] sm:$0x3] %vm1186, %v1935
    %1937 = vst.msk [vmem:[#allocation5] sm:$0x3] %vm552, %v1833
    %1939 = vrot.lane.b32.xlu0 %v1710, 96
    %v1940 = vpop.permute.xlu0 %1939
    %1942 = vst.msk [vmem:[#allocation6] sm:$0x3] %vm552, %v1940
    %1944 = vrot.lane.b32.xlu0 %v1935, 32
    %v1945 = vpop.permute.xlu0 %1944
    %s1947 = scalar_lea.vmem [#allocation5], 2
    %1948 = vst.msk [vmem:[%s1947] sm:$0x3] %vm552, %v1945
    %1950 = vrot.lane.b32.xlu0 %v1929, 96
    %v1951 = vpop.permute.xlu0 %1950
    %s1953 = scalar_lea.vmem [#allocation6], 2
    %1954 = vst.msk [vmem:[%s1953] sm:$0x3] %vm552, %v1951
    // Predicated region
    $region14: #{lstm_encoder_forward.1} parent=1 // pred_check
      _
    $region15: #{lstm_encoder_forward.1} parent=1 // pred_check_branch
      %1956 = sbr.rel (0) target = $region17
    $region16: #{lstm_encoder_forward.1} parent=1 // pred_region
      _
    $region17: #{lstm_encoder_forward.1} parent=1 // pred_fallthru
      _
    // Predicated region
    $region18: #{lstm_encoder_forward.1} parent=1 // pred_check
      _
    $region19: #{lstm_encoder_forward.1} parent=1 // pred_check_branch
      %1958 = sbr.rel (0) target = $region21
    $region20: #{lstm_encoder_forward.1} parent=1 // pred_region
      %s1960 = ssub.s32 64, 64
      %1961 = vsyncadd [#allocation4], %s1960
      %s1962 = sshll.u32 [#allocation5], 4
      %s1963 = int_to_ptr.vmem [resolvable:$true] %s1962
      %1968 = dma.vmem_to_hbm [thread:$0]  %s1963, 64, %s3, [#allocation4], 32, 32, 2
    $region21: #{lstm_encoder_forward.1} parent=1 // pred_fallthru
      _
    // Predicated region
    $region22: #{lstm_encoder_forward.1} parent=1 // pred_check
      _
    $region23: #{lstm_encoder_forward.1} parent=1 // pred_check_branch
      %1970 = sbr.rel (0) target = $region25
    $region24: #{lstm_encoder_forward.1} parent=1 // pred_region
      %s1972 = ssub.s32 64, 64
      %1973 = vsyncadd [#allocation7], %s1972
      %s1974 = sshll.u32 [#allocation6], 4
      %s1975 = int_to_ptr.vmem [resolvable:$true] %s1974
      %1980 = dma.vmem_to_hbm [thread:$0]  %s1975, 64, %s4, [#allocation7], 32, 32, 2
    $region25: #{lstm_encoder_forward.1} parent=1 // pred_fallthru
      _
    // Predicated region
    $region26: #{lstm_encoder_forward.1} parent=1 // pred_check
      _
    $region27: #{lstm_encoder_forward.1} parent=1 // pred_check_branch
      %1982 = sbr.rel (0) target = $region29
    $region28: #{lstm_encoder_forward.1} parent=1 // pred_region
      _
    $region29: #{lstm_encoder_forward.1} parent=1 // pred_fallthru
      _
    // Predicated region
    $region30: #{lstm_encoder_forward.1} parent=1 // pred_check
      _
    $region31: #{lstm_encoder_forward.1} parent=1 // pred_check_branch
      %1984 = sbr.rel (0) target = $region33
    $region32: #{lstm_encoder_forward.1} parent=1 // pred_region
      %1985 = dma.done [#allocation4], 64
    $region33: #{lstm_encoder_forward.1} parent=1 // pred_fallthru
      _
    // Predicated region
    $region34: #{lstm_encoder_forward.1} parent=1 // pred_check
      _
    $region35: #{lstm_encoder_forward.1} parent=1 // pred_check_branch
      %1987 = sbr.rel (0) target = $region37
    $region36: #{lstm_encoder_forward.1} parent=1 // pred_region
      %1988 = dma.done [#allocation7], 64
    $region37: #{lstm_encoder_forward.1} parent=1 // pred_fallthru
      _
    %1989 = vsyncpa [#allocation3], 1
    %1990 = vsyncpa [#allocation4], 1
    %1991 = vsyncpa [#allocation7], 1

</llo_original>
